<compile_context>
chip_gen: v7x
topology: tpu7x:2x2x1
jax: 0.10.0
libtpu: 0.0.40
codegen_flags: <defaults>
</compile_context>

<pallas_src>
import functools

import jax
import jax.numpy as jnp
import numpy as np
from jax.experimental import pallas as pl
from jax.experimental.pallas import tpu as pltpu

EPS = 1e-5          # nn.BatchNorm2d default eps
LANE = 128          # TPU lane width; C_out is padded to a multiple of this
VMEM_LIMIT = 48 * 1024 * 1024   # explicit scoped-VMEM budget (fits v5e/v6e/v7x)


def _round_up(x, m):
    return ((x + m - 1) // m) * m


# ----------------------------- Pallas kernels ------------------------------ #

def _mm_stats_kernel(p_ref, w_ref, s_ref):
    """Phase A: bf16 matmul (f32 acc) -> per-tile partial [sum, sum_sq] over rows."""
    conv = jnp.dot(p_ref[...], w_ref[...], preferred_element_type=jnp.float32)
    s = jnp.sum(conv, axis=0, keepdims=True)
    ss = jnp.sum(conv * conv, axis=0, keepdims=True)
    s_ref[0] = jnp.concatenate([s, ss], axis=0)


def _mm_stats_proj_kernel(p_ref, w_ref, sp_ref, sw_ref, s_ref):
    """Phase A for conv2 with fused projection-shortcut stats (1x1 conv)."""
    conv = jnp.dot(p_ref[...], w_ref[...], preferred_element_type=jnp.float32)
    sc = jnp.dot(sp_ref[...], sw_ref[...], preferred_element_type=jnp.float32)
    s_ref[0] = jnp.concatenate(
        [jnp.sum(conv, axis=0, keepdims=True),
         jnp.sum(conv * conv, axis=0, keepdims=True),
         jnp.sum(sc, axis=0, keepdims=True),
         jnp.sum(sc * sc, axis=0, keepdims=True)], axis=0)


def _mm_affine_kernel(p_ref, w_ref, a_ref, b_ref, o_ref, *, relu):
    """Phase B: matmul + BN affine (+ ReLU)."""
    conv = jnp.dot(p_ref[...], w_ref[...], preferred_element_type=jnp.float32)
    y = conv * a_ref[...] + b_ref[...]
    if relu:
        y = jnp.maximum(y, 0.0)
    o_ref[...] = y.astype(o_ref.dtype)


def _mm_affine_add_relu_kernel(p_ref, w_ref, a_ref, b_ref, r_ref, o_ref):
    """Phase B: matmul + BN affine + identity residual + ReLU."""
    conv = jnp.dot(p_ref[...], w_ref[...], preferred_element_type=jnp.float32)
    y = conv * a_ref[...] + b_ref[...] + r_ref[...]
    o_ref[...] = jnp.maximum(y, 0.0).astype(o_ref.dtype)


def _mm_affine_proj_add_relu_kernel(p_ref, w_ref, a_ref, b_ref,
                                    sp_ref, sw_ref, sa_ref, sb_ref, o_ref):
    """Phase B: matmul + BN affine + fused projection shortcut (1x1 conv + BN) + ReLU."""
    conv = jnp.dot(p_ref[...], w_ref[...], preferred_element_type=jnp.float32)
    y = conv * a_ref[...] + b_ref[...]
    sc = jnp.dot(sp_ref[...], sw_ref[...], preferred_element_type=jnp.float32)
    y = y + sc * sa_ref[...] + sb_ref[...]
    o_ref[...] = jnp.maximum(y, 0.0).astype(o_ref.dtype)


# --------------------------- pallas_call wrappers --------------------------- #

def _compiler_params():
    return pltpu.CompilerParams(
        dimension_semantics=("parallel",),       # M tiles are independent in both phases
        vmem_limit_bytes=VMEM_LIMIT)


def _stats_call(p, w, tm, nt, cp, *, sc_patches=None, sc_weight=None):
    mp, k = p.shape
    args = [p, w]
    in_specs = [pl.BlockSpec((tm, k), lambda i: (i, 0)),
                pl.BlockSpec((k, cp), lambda i: (0, 0))]
    flops = 2 * mp * k * cp
    if sc_patches is None:
        kernel, nrows = _mm_stats_kernel, 2
    else:
        ksc = sc_patches.shape[1]
        args += [sc_patches, sc_weight]
        in_specs += [pl.BlockSpec((tm, ksc), lambda i: (i, 0)),
                     pl.BlockSpec((ksc, cp), lambda i: (0, 0))]
        flops += 2 * mp * ksc * cp
        kernel, nrows = _mm_stats_proj_kernel, 4
    bytes_acc = int(sum(a.size * a.dtype.itemsize for a in args) + nt * nrows * cp * 4)
    return pl.pallas_call(
        kernel,
        out_shape=jax.ShapeDtypeStruct((nt, nrows, cp), jnp.float32),
        grid_spec=pltpu.PrefetchScalarGridSpec(
            num_scalar_prefetch=0,
            grid=(nt,),
            in_specs=in_specs,
            out_specs=pl.BlockSpec((1, nrows, cp), lambda i: (i, 0, 0))),
        compiler_params=_compiler_params(),
        cost_estimate=pl.CostEstimate(flops=int(flops), transcendentals=0,
                                      bytes_accessed=bytes_acc),
    )(*args)


def _apply_call(p, w, scale, shift, tm, nt, cp, *, relu=True,
                out_dtype=jnp.float32, residual=None, proj=None):
    mp, k = p.shape
    args = [p, w, scale, shift]
    in_specs = [pl.BlockSpec((tm, k), lambda i: (i, 0)),
                pl.BlockSpec((k, cp), lambda i: (0, 0)),
                pl.BlockSpec((1, cp), lambda i: (0, 0)),
                pl.BlockSpec((1, cp), lambda i: (0, 0))]
    flops = 2 * mp * k * cp
    if residual is not None:
        kernel = _mm_affine_add_relu_kernel
        args.append(residual)
        in_specs.append(pl.BlockSpec((tm, cp), lambda i: (i, 0)))
    elif proj is not None:
        sp, sw, sa, sb = proj
        ksc = sp.shape[1]
        kernel = _mm_affine_proj_add_relu_kernel
        args += [sp, sw, sa, sb]
        in_specs += [pl.BlockSpec((tm, ksc), lambda i: (i, 0)),
                     pl.BlockSpec((ksc, cp), lambda i: (0, 0)),
                     pl.BlockSpec((1, cp), lambda i: (0, 0)),
                     pl.BlockSpec((1, cp), lambda i: (0, 0))]
        flops += 2 * mp * ksc * cp
    else:
        kernel = functools.partial(_mm_affine_kernel, relu=relu)
    bytes_acc = int(sum(a.size * a.dtype.itemsize for a in args)
                    + mp * cp * np.dtype(out_dtype).itemsize)
    return pl.pallas_call(
        kernel,
        out_shape=jax.ShapeDtypeStruct((mp, cp), out_dtype),
        grid_spec=pltpu.PrefetchScalarGridSpec(
            num_scalar_prefetch=0,
            grid=(nt,),
            in_specs=in_specs,
            out_specs=pl.BlockSpec((tm, cp), lambda i: (i, 0))),
        compiler_params=_compiler_params(),
        cost_estimate=pl.CostEstimate(flops=int(flops), transcendentals=0,
                                      bytes_accessed=bytes_acc),
    )(*args)


# ------------------------------ JAX glue ----------------------------------- #

def _pad_rows(a, mp):
    return jnp.pad(a, ((0, mp - a.shape[0]), (0, 0)))


def _pad_cols(a, cp):
    return jnp.pad(a, ((0, 0), (0, cp - a.shape[1])))


def _pad_vec(v, cp):
    return jnp.pad(v.astype(jnp.float32), (0, cp - v.shape[0]))


def _im2col_3x3(x_nhwc, stride):
    """x: (N,H,W,C), pad=1, k=3 -> patches (N*Ho*Wo, 9*C), ordered (kh, kw, C)."""
    N, H, W, C = x_nhwc.shape
    xp = jnp.pad(x_nhwc, ((0, 0), (1, 1), (1, 1), (0, 0)))
    Ho = (H + 2 - 3) // stride + 1
    Wo = (W + 2 - 3) // stride + 1
    taps = []
    for dh in range(3):
        for dw in range(3):
            taps.append(xp[:, dh:dh + (Ho - 1) * stride + 1:stride,
                           dw:dw + (Wo - 1) * stride + 1:stride, :])
    p = jnp.stack(taps, axis=3)                      # (N, Ho, Wo, 9, C)
    return p.reshape(N * Ho * Wo, 9 * C), Ho, Wo


def _w3x3_to_mat(w_oihw):
    """(Cout, Cin, 3, 3) -> (9*Cin, Cout), matching (kh, kw, Cin) patch order."""
    cout, cin = w_oihw.shape[0], w_oihw.shape[1]
    return jnp.transpose(w_oihw, (2, 3, 1, 0)).reshape(9 * cin, cout)


def _bn_stats_to_affine(stats, gamma, beta, m):
    """Combine per-tile [sum, sum_sq] partials into BN affine scale/shift (f32)."""
    s = jnp.sum(stats[:, 0, :], axis=0)
    ss = jnp.sum(stats[:, 1, :], axis=0)
    mean = s / m
    var = jnp.maximum(ss / m - mean * mean, 0.0)     # biased var (training-mode BN)
    scale = gamma * jax.lax.rsqrt(var + EPS)
    shift = beta - mean * scale
    return scale.reshape(1, -1), shift.reshape(1, -1)


def basic_block_forward(x_nchw, params, *, in_planes, planes, stride, tile_m=512):
    x = jnp.transpose(x_nchw, (0, 2, 3, 1)).astype(jnp.float32)       # NHWC
    N, H, W, _ = x.shape
    cp = _round_up(planes, LANE)                                      # lane-dense C_out

    # ---- conv1 (3x3, stride) + bn1 + relu ----
    # TODO(synk): replace JAX-side im2col with an in-kernel halo-tile conv (9 shifted
    # matmuls on an NHWC VMEM tile) to remove the 9x HBM read expansion of the patches.
    p1, Ho, Wo = _im2col_3x3(x, stride)
    M = N * Ho * Wo
    tm = min(tile_m, _round_up(M, 16))
    mp = _round_up(M, tm)
    nt = mp // tm

    p1 = _pad_rows(p1, mp).astype(jnp.bfloat16)
    w1 = _pad_cols(_w3x3_to_mat(params["conv1_w"]), cp).astype(jnp.bfloat16)
    g1, b1 = _pad_vec(params["bn1_g"], cp), _pad_vec(params["bn1_b"], cp)

    stats1 = _stats_call(p1, w1, tm, nt, cp)
    a1, s1 = _bn_stats_to_affine(stats1, g1, b1, M)
    out1 = _apply_call(p1, w1, a1, s1, tm, nt, cp,
                       relu=True, out_dtype=jnp.bfloat16)             # (mp, cp) bf16
    out1_nhwc = out1[:M, :planes].reshape(N, Ho, Wo, planes)

    # ---- conv2 (3x3, stride 1) + bn2 + shortcut add + relu ----
    p2, _, _ = _im2col_3x3(out1_nhwc, 1)
    p2 = _pad_rows(p2, mp)                                            # bf16
    w2 = _pad_cols(_w3x3_to_mat(params["conv2_w"]), cp).astype(jnp.bfloat16)
    g2, b2 = _pad_vec(params["bn2_g"], cp), _pad_vec(params["bn2_b"], cp)

    if stride != 1 or in_planes != planes:
        # projection shortcut: 1x1 strided conv + BN fused into the conv2 kernels.
        ps = _pad_rows(x[:, ::stride, ::stride, :].reshape(M, in_planes), mp)
        ps = ps.astype(jnp.bfloat16)
        wsc = _pad_cols(params["sc_w"].reshape(planes, in_planes).T, cp).astype(jnp.bfloat16)
        gsc, bsc = _pad_vec(params["sc_g"], cp), _pad_vec(params["sc_b"], cp)

        stats2 = _stats_call(p2, w2, tm, nt, cp, sc_patches=ps, sc_weight=wsc)
        a2, s2 = _bn_stats_to_affine(stats2[:, :2], g2, b2, M)
        asc, ssc = _bn_stats_to_affine(stats2[:, 2:], gsc, bsc, M)
        out = _apply_call(p2, w2, a2, s2, tm, nt, cp, proj=(ps, wsc, asc, ssc))
    else:
        # identity shortcut (row order of x matches out2 only because this branch is
        # guarded by stride == 1 and in_planes == planes).
        res = _pad_cols(_pad_rows(x.reshape(M, in_planes), mp), cp)   # f32
        stats2 = _stats_call(p2, w2, tm, nt, cp)
        a2, s2 = _bn_stats_to_affine(stats2, g2, b2, M)
        out = _apply_call(p2, w2, a2, s2, tm, nt, cp, residual=res)

    out = out[:M, :planes].reshape(N, Ho, Wo, planes)
    return jnp.transpose(out, (0, 3, 1, 2))                           # back to NCHW


# --------------------------- pure-JAX references ---------------------------- #

def _ref_conv(x, w, stride, pad):
    return jax.lax.conv_general_dilated(
        x, w, (stride, stride), ((pad, pad), (pad, pad)),
        dimension_numbers=("NCHW", "OIHW", "NCHW"),
        preferred_element_type=jnp.float32)


def _ref_bn(x, g, b):
    mean = x.mean(axis=(0, 2, 3), keepdims=True)
    var = ((x - mean) ** 2).mean(axis=(0, 2, 3), keepdims=True)       # biased (training)
    return (x - mean) / jnp.sqrt(var + EPS) * g.reshape(1, -1, 1, 1) + b.reshape(1, -1, 1, 1)


def _ref_forward(x, p, in_planes, planes, stride, *, match_bf16=False):
    """f32 reference; with match_bf16=True the matmul operands are quantized to bf16
    at the same points as the kernel pipeline (MXU inputs), BN math stays f32."""
    cast = (lambda a: a.astype(jnp.bfloat16)) if match_bf16 else (lambda a: a)
    out = jax.nn.relu(_ref_bn(_ref_conv(cast(x), cast(p["conv1_w"]), stride, 1),
                              p["bn1_g"], p["bn1_b"]))
    out = _ref_bn(_ref_conv(cast(out), cast(p["conv2_w"]), 1, 1), p["bn2_g"], p["bn2_b"])
    if stride != 1 or in_planes != planes:
        sc = _ref_bn(_ref_conv(cast(x), cast(p["sc_w"]), stride, 0), p["sc_g"], p["sc_b"])
    else:
        sc = x
    return jax.nn.relu(out + sc)


# --------------------------------- main ------------------------------------ #

def _make_params(key, in_planes, planes, with_proj):
    ks = jax.random.split(key, 8)
    p = {
        "conv1_w": 0.2 * jax.random.normal(ks[0], (planes, in_planes, 3, 3), jnp.float32),
        "bn1_g": 1.0 + 0.1 * jax.random.normal(ks[1], (planes,), jnp.float32),
        "bn1_b": 0.1 * jax.random.normal(ks[2], (planes,), jnp.float32),
        "conv2_w": 0.2 * jax.random.normal(ks[3], (planes, planes, 3, 3), jnp.float32),
        "bn2_g": 1.0 + 0.1 * jax.random.normal(ks[4], (planes,), jnp.float32),
        "bn2_b": 0.1 * jax.random.normal(ks[5], (planes,), jnp.float32),
    }
    if with_proj:
        p["sc_w"] = 0.2 * jax.random.normal(ks[6], (planes, in_planes, 1, 1), jnp.float32)
        p["sc_g"] = 1.0 + 0.1 * jax.random.normal(ks[7], (planes,), jnp.float32)
        p["sc_b"] = jnp.zeros((planes,), jnp.float32)
    return p


def _check(x, params, in_planes, planes, stride, tile_m):
    fwd = jax.jit(functools.partial(basic_block_forward, in_planes=in_planes,
                                    planes=planes, stride=stride, tile_m=tile_m))
    out = jax.block_until_ready(fwd(x, params))
    # tight check vs a reference that quantizes matmul operands to bf16 like the kernel
    ref_m = jax.block_until_ready(
        _ref_forward(x, params, in_planes, planes, stride, match_bf16=True))
    np.testing.assert_allclose(np.asarray(out), np.asarray(ref_m), rtol=1e-2, atol=1e-2)
    # loose check vs the pure-f32 reference (bf16 MXU inputs per perf guidance)
    ref_f = jax.block_until_ready(_ref_forward(x, params, in_planes, planes, stride))
    np.testing.assert_allclose(np.asarray(out), np.asarray(ref_f), rtol=1e-1, atol=1e-1)


if __name__ == "__main__":
    key = jax.random.PRNGKey(0)
    kp1, kx1, kp2, kx2 = jax.random.split(key, 4)

    # 1) projection-shortcut path: stride=2, in_planes != planes  (x: 2x4x16x16)
    in_planes, planes, stride = 4, 8, 2
    params1 = _make_params(kp1, in_planes, planes, with_proj=True)
    x1 = jax.random.normal(kx1, (2, in_planes, 16, 16), jnp.float32)
    _check(x1, params1, in_planes, planes, stride, tile_m=64)   # small tile -> 2-step grid

    # 2) identity-shortcut path: stride=1, in_planes == planes  (x: 2x8x16x16)
    in_planes, planes, stride = 8, 8, 1
    params2 = _make_params(kp2, in_planes, planes, with_proj=False)
    x2 = jax.random.normal(kx2, (2, in_planes, 16, 16), jnp.float32)
    _check(x2, params2, in_planes, planes, stride, tile_m=64)   # 8-step grid

    print("KERNEL_OK")
</pallas_src>

<mosaic_0001>
module attributes {stable_mosaic.version = 11 : i64} {
  func.func @_mm_stats_kernel(%arg0: i32, %arg1: memref<64x36xbf16, #tpu.memory_space<vmem>>, %arg2: memref<36x128xbf16, #tpu.memory_space<vmem>>, %arg3: memref<1x2x128xf32, #tpu.memory_space<vmem>>) attributes {dimension_semantics = [#tpu.dimension_semantics<parallel>], iteration_bounds = array<i64: 2>, scalar_prefetch = 0 : i64, scratch_operands = 0 : i64, tpu.core_type = #tpu.core_type<tc>, window_params = [{transform_indices = @transform_0, window_bounds = array<i64: 64, 36>}, {pipeline_mode = #tpu.pipeline_mode<synchronous>, transform_indices = @transform_1, window_bounds = array<i64: 36, 128>}, {transform_indices = @transform_2, window_bounds = array<i64: 1, 2, 128>}]} {
    %c0 = arith.constant 0 : index
    %c0_0 = arith.constant 0 : index
    %0 = vector.load %arg1[%c0, %c0_0] : memref<64x36xbf16, #tpu.memory_space<vmem>>, vector<64x36xbf16>
    %c0_1 = arith.constant 0 : index
    %c0_2 = arith.constant 0 : index
    %1 = vector.load %arg2[%c0_1, %c0_2] : memref<36x128xbf16, #tpu.memory_space<vmem>>, vector<36x128xbf16>
    %cst = arith.constant dense<0.000000e+00> : vector<64x128xf32>
    %2 = tpu.matmul %0, %1, %cst {dimension_numbers = #tpu.dot_dimension_numbers<[1], [0], [0], [1], [0, 0, 1, 1], [], []>} : vector<64x36xbf16>, vector<36x128xbf16>, vector<64x128xf32> -> vector<64x128xf32>
    %cst_3 = arith.constant dense<0.000000e+00> : vector<128xf32>
    %3 = vector.multi_reduction <add>, %2, %cst_3 [0] : vector<64x128xf32> to vector<128xf32>
    %4 = vector.shape_cast %3 : vector<128xf32> to vector<1x128xf32>
    %5 = arith.mulf %2, %2 : vector<64x128xf32>
    %cst_4 = arith.constant dense<0.000000e+00> : vector<128xf32>
    %6 = vector.multi_reduction <add>, %5, %cst_4 [0] : vector<64x128xf32> to vector<128xf32>
    %7 = vector.shape_cast %6 : vector<128xf32> to vector<1x128xf32>
    %8 = tpu.concatenate %4, %7 in 0 : vector<1x128xf32>, vector<1x128xf32> -> vector<2x128xf32>
    %c0_5 = arith.constant 0 : index
    %c0_6 = arith.constant 0 : index
    %c0_7 = arith.constant 0 : index
    %9 = vector.load %arg3[%c0_5, %c0_6, %c0_7] : memref<1x2x128xf32, #tpu.memory_space<vmem>>, vector<1x2x128xf32>
    %10 = vector.shape_cast %9 : vector<1x2x128xf32> to vector<2x128xf32>
    %11 = vector.shape_cast %8 : vector<2x128xf32> to vector<1x2x128xf32>
    tpu.vector_store %arg3[%c0_5, %c0_6, %c0_7], %11 {strides = array<i32>} : memref<1x2x128xf32, #tpu.memory_space<vmem>>, vector<1x2x128xf32>,
    return
  }
  func.func @transform_0(%arg0: i32) -> (i32, i32) {
    %c0_i32 = arith.constant 0 : i32
    %c0_i32_0 = arith.constant 0 : i32
    return %arg0, %c0_i32 : i32, i32
  }
  func.func @transform_1(%arg0: i32) -> (i32, i32) {
    %c0_i32 = arith.constant 0 : i32
    %c0_i32_0 = arith.constant 0 : i32
    %c0_i32_1 = arith.constant 0 : i32
    return %c0_i32, %c0_i32_0 : i32, i32
  }
  func.func @transform_2(%arg0: i32) -> (i32, i32, i32) {
    %c0_i32 = arith.constant 0 : i32
    %c0_i32_0 = arith.constant 0 : i32
    %c0_i32_1 = arith.constant 0 : i32
    return %arg0, %c0_i32, %c0_i32_0 : i32, i32, i32
  }
}

module attributes {stable_mosaic.version = 11 : i64} {
  func.func @_mm_affine_kernel(%arg0: i32, %arg1: memref<64x36xbf16, #tpu.memory_space<vmem>>, %arg2: memref<36x128xbf16, #tpu.memory_space<vmem>>, %arg3: memref<1x128xf32, #tpu.memory_space<vmem>>, %arg4: memref<1x128xf32, #tpu.memory_space<vmem>>, %arg5: memref<64x128xbf16, #tpu.memory_space<vmem>>) attributes {dimension_semantics = [#tpu.dimension_semantics<parallel>], iteration_bounds = array<i64: 2>, scalar_prefetch = 0 : i64, scratch_operands = 0 : i64, tpu.core_type = #tpu.core_type<tc>, window_params = [{transform_indices = @transform_0, window_bounds = array<i64: 64, 36>}, {pipeline_mode = #tpu.pipeline_mode<synchronous>, transform_indices = @transform_1, window_bounds = array<i64: 36, 128>}, {pipeline_mode = #tpu.pipeline_mode<synchronous>, transform_indices = @transform_2, window_bounds = array<i64: 1, 128>}, {pipeline_mode = #tpu.pipeline_mode<synchronous>, transform_indices = @transform_3, window_bounds = array<i64: 1, 128>}, {transform_indices = @transform_4, window_bounds = array<i64: 64, 128>}]} {
    %c0 = arith.constant 0 : index
    %c0_0 = arith.constant 0 : index
    %0 = vector.load %arg1[%c0, %c0_0] : memref<64x36xbf16, #tpu.memory_space<vmem>>, vector<64x36xbf16>
    %c0_1 = arith.constant 0 : index
    %c0_2 = arith.constant 0 : index
    %1 = vector.load %arg2[%c0_1, %c0_2] : memref<36x128xbf16, #tpu.memory_space<vmem>>, vector<36x128xbf16>
    %cst = arith.constant dense<0.000000e+00> : vector<64x128xf32>
    %2 = tpu.matmul %0, %1, %cst {dimension_numbers = #tpu.dot_dimension_numbers<[1], [0], [0], [1], [0, 0, 1, 1], [], []>} : vector<64x36xbf16>, vector<36x128xbf16>, vector<64x128xf32> -> vector<64x128xf32>
    %c0_3 = arith.constant 0 : index
    %c0_4 = arith.constant 0 : index
    %3 = vector.load %arg3[%c0_3, %c0_4] : memref<1x128xf32, #tpu.memory_space<vmem>>, vector<1x128xf32>
    %4 = vector.broadcast %3 : vector<1x128xf32> to vector<64x128xf32>
    %5 = arith.mulf %2, %4 : vector<64x128xf32>
    %c0_5 = arith.constant 0 : index
    %c0_6 = arith.constant 0 : index
    %6 = vector.load %arg4[%c0_5, %c0_6] : memref<1x128xf32, #tpu.memory_space<vmem>>, vector<1x128xf32>
    %7 = vector.broadcast %6 : vector<1x128xf32> to vector<64x128xf32>
    %8 = arith.addf %5, %7 : vector<64x128xf32>
    %cst_7 = arith.constant 0.000000e+00 : f32
    %9 = vector.broadcast %cst_7 : f32 to vector<64x128xf32>
    %10 = arith.maximumf %8, %9 : vector<64x128xf32>
    %11 = arith.truncf %10 : vector<64x128xf32> to vector<64x128xbf16>
    %c0_8 = arith.constant 0 : index
    %c0_9 = arith.constant 0 : index
    %12 = vector.load %arg5[%c0_8, %c0_9] : memref<64x128xbf16, #tpu.memory_space<vmem>>, vector<64x128xbf16>
    tpu.vector_store %arg5[%c0_8, %c0_9], %11 {strides = array<i32>} : memref<64x128xbf16, #tpu.memory_space<vmem>>, vector<64x128xbf16>,
    return
  }
  func.func @transform_0(%arg0: i32) -> (i32, i32) {
    %c0_i32 = arith.constant 0 : i32
    %c0_i32_0 = arith.constant 0 : i32
    return %arg0, %c0_i32 : i32, i32
  }
  func.func @transform_1(%arg0: i32) -> (i32, i32) {
    %c0_i32 = arith.constant 0 : i32
    %c0_i32_0 = arith.constant 0 : i32
    %c0_i32_1 = arith.constant 0 : i32
    return %c0_i32, %c0_i32_0 : i32, i32
  }
  func.func @transform_2(%arg0: i32) -> (i32, i32) {
    %c0_i32 = arith.constant 0 : i32
    %c0_i32_0 = arith.constant 0 : i32
    %c0_i32_1 = arith.constant 0 : i32
    return %c0_i32, %c0_i32_0 : i32, i32
  }
  func.func @transform_3(%arg0: i32) -> (i32, i32) {
    %c0_i32 = arith.constant 0 : i32
    %c0_i32_0 = arith.constant 0 : i32
    %c0_i32_1 = arith.constant 0 : i32
    return %c0_i32, %c0_i32_0 : i32, i32
  }
  func.func @transform_4(%arg0: i32) -> (i32, i32) {
    %c0_i32 = arith.constant 0 : i32
    %c0_i32_0 = arith.constant 0 : i32
    return %arg0, %c0_i32 : i32, i32
  }
}

module attributes {stable_mosaic.version = 11 : i64} {
  func.func @_mm_stats_proj_kernel(%arg0: i32, %arg1: memref<64x72xbf16, #tpu.memory_space<vmem>>, %arg2: memref<72x128xbf16, #tpu.memory_space<vmem>>, %arg3: memref<64x4xbf16, #tpu.memory_space<vmem>>, %arg4: memref<4x128xbf16, #tpu.memory_space<vmem>>, %arg5: memref<1x4x128xf32, #tpu.memory_space<vmem>>) attributes {dimension_semantics = [#tpu.dimension_semantics<parallel>], iteration_bounds = array<i64: 2>, scalar_prefetch = 0 : i64, scratch_operands = 0 : i64, tpu.core_type = #tpu.core_type<tc>, window_params = [{transform_indices = @transform_0, window_bounds = array<i64: 64, 72>}, {pipeline_mode = #tpu.pipeline_mode<synchronous>, transform_indices = @transform_1, window_bounds = array<i64: 72, 128>}, {transform_indices = @transform_2, window_bounds = array<i64: 64, 4>}, {pipeline_mode = #tpu.pipeline_mode<synchronous>, transform_indices = @transform_3, window_bounds = array<i64: 4, 128>}, {transform_indices = @transform_4, window_bounds = array<i64: 1, 4, 128>}]} {
    %c0 = arith.constant 0 : index
    %c0_0 = arith.constant 0 : index
    %0 = vector.load %arg1[%c0, %c0_0] : memref<64x72xbf16, #tpu.memory_space<vmem>>, vector<64x72xbf16>
    %c0_1 = arith.constant 0 : index
    %c0_2 = arith.constant 0 : index
    %1 = vector.load %arg2[%c0_1, %c0_2] : memref<72x128xbf16, #tpu.memory_space<vmem>>, vector<72x128xbf16>
    %cst = arith.constant dense<0.000000e+00> : vector<64x128xf32>
    %2 = tpu.matmul %0, %1, %cst {dimension_numbers = #tpu.dot_dimension_numbers<[1], [0], [0], [1], [0, 0, 1, 1], [], []>} : vector<64x72xbf16>, vector<72x128xbf16>, vector<64x128xf32> -> vector<64x128xf32>
    %c0_3 = arith.constant 0 : index
    %c0_4 = arith.constant 0 : index
    %3 = vector.load %arg3[%c0_3, %c0_4] : memref<64x4xbf16, #tpu.memory_space<vmem>>, vector<64x4xbf16>
    %c0_5 = arith.constant 0 : index
    %c0_6 = arith.constant 0 : index
    %4 = vector.load %arg4[%c0_5, %c0_6] : memref<4x128xbf16, #tpu.memory_space<vmem>>, vector<4x128xbf16>
    %cst_7 = arith.constant dense<0.000000e+00> : vector<64x128xf32>
    %5 = tpu.matmul %3, %4, %cst_7 {dimension_numbers = #tpu.dot_dimension_numbers<[1], [0], [0], [1], [0, 0, 1, 1], [], []>} : vector<64x4xbf16>, vector<4x128xbf16>, vector<64x128xf32> -> vector<64x128xf32>
    %cst_8 = arith.constant dense<0.000000e+00> : vector<128xf32>
    %6 = vector.multi_reduction <add>, %2, %cst_8 [0] : vector<64x128xf32> to vector<128xf32>
    %7 = vector.shape_cast %6 : vector<128xf32> to vector<1x128xf32>
    %8 = arith.mulf %2, %2 : vector<64x128xf32>
    %cst_9 = arith.constant dense<0.000000e+00> : vector<128xf32>
    %9 = vector.multi_reduction <add>, %8, %cst_9 [0] : vector<64x128xf32> to vector<128xf32>
    %10 = vector.shape_cast %9 : vector<128xf32> to vector<1x128xf32>
    %cst_10 = arith.constant dense<0.000000e+00> : vector<128xf32>
    %11 = vector.multi_reduction <add>, %5, %cst_10 [0] : vector<64x128xf32> to vector<128xf32>
    %12 = vector.shape_cast %11 : vector<128xf32> to vector<1x128xf32>
    %13 = arith.mulf %5, %5 : vector<64x128xf32>
    %cst_11 = arith.constant dense<0.000000e+00> : vector<128xf32>
    %14 = vector.multi_reduction <add>, %13, %cst_11 [0] : vector<64x128xf32> to vector<128xf32>
    %15 = vector.shape_cast %14 : vector<128xf32> to vector<1x128xf32>
    %16 = tpu.concatenate %7, %10, %12, %15 in 0 : vector<1x128xf32>, vector<1x128xf32>, vector<1x128xf32>, vector<1x128xf32> -> vector<4x128xf32>
    %c0_12 = arith.constant 0 : index
    %c0_13 = arith.constant 0 : index
    %c0_14 = arith.constant 0 : index
    %17 = vector.load %arg5[%c0_12, %c0_13, %c0_14] : memref<1x4x128xf32, #tpu.memory_space<vmem>>, vector<1x4x128xf32>
    %18 = vector.shape_cast %17 : vector<1x4x128xf32> to vector<4x128xf32>
    %19 = vector.shape_cast %16 : vector<4x128xf32> to vector<1x4x128xf32>
    tpu.vector_store %arg5[%c0_12, %c0_13, %c0_14], %19 {strides = array<i32>} : memref<1x4x128xf32, #tpu.memory_space<vmem>>, vector<1x4x128xf32>,
    return
  }
  func.func @transform_0(%arg0: i32) -> (i32, i32) {
    %c0_i32 = arith.constant 0 : i32
    %c0_i32_0 = arith.constant 0 : i32
    return %arg0, %c0_i32 : i32, i32
  }
  func.func @transform_1(%arg0: i32) -> (i32, i32) {
    %c0_i32 = arith.constant 0 : i32
    %c0_i32_0 = arith.constant 0 : i32
    %c0_i32_1 = arith.constant 0 : i32
    return %c0_i32, %c0_i32_0 : i32, i32
  }
  func.func @transform_2(%arg0: i32) -> (i32, i32) {
    %c0_i32 = arith.constant 0 : i32
    %c0_i32_0 = arith.constant 0 : i32
    return %arg0, %c0_i32 : i32, i32
  }
  func.func @transform_3(%arg0: i32) -> (i32, i32) {
    %c0_i32 = arith.constant 0 : i32
    %c0_i32_0 = arith.constant 0 : i32
    %c0_i32_1 = arith.constant 0 : i32
    return %c0_i32, %c0_i32_0 : i32, i32
  }
  func.func @transform_4(%arg0: i32) -> (i32, i32, i32) {
    %c0_i32 = arith.constant 0 : i32
    %c0_i32_0 = arith.constant 0 : i32
    %c0_i32_1 = arith.constant 0 : i32
    return %arg0, %c0_i32, %c0_i32_0 : i32, i32, i32
  }
}

module attributes {stable_mosaic.version = 11 : i64} {
  func.func @_mm_affine_proj_add_relu_kernel(%arg0: i32, %arg1: memref<64x72xbf16, #tpu.memory_space<vmem>>, %arg2: memref<72x128xbf16, #tpu.memory_space<vmem>>, %arg3: memref<1x128xf32, #tpu.memory_space<vmem>>, %arg4: memref<1x128xf32, #tpu.memory_space<vmem>>, %arg5: memref<64x4xbf16, #tpu.memory_space<vmem>>, %arg6: memref<4x128xbf16, #tpu.memory_space<vmem>>, %arg7: memref<1x128xf32, #tpu.memory_space<vmem>>, %arg8: memref<1x128xf32, #tpu.memory_space<vmem>>, %arg9: memref<64x128xf32, #tpu.memory_space<vmem>>) attributes {dimension_semantics = [#tpu.dimension_semantics<parallel>], iteration_bounds = array<i64: 2>, scalar_prefetch = 0 : i64, scratch_operands = 0 : i64, tpu.core_type = #tpu.core_type<tc>, window_params = [{transform_indices = @transform_0, window_bounds = array<i64: 64, 72>}, {pipeline_mode = #tpu.pipeline_mode<synchronous>, transform_indices = @transform_1, window_bounds = array<i64: 72, 128>}, {pipeline_mode = #tpu.pipeline_mode<synchronous>, transform_indices = @transform_2, window_bounds = array<i64: 1, 128>}, {pipeline_mode = #tpu.pipeline_mode<synchronous>, transform_indices = @transform_3, window_bounds = array<i64: 1, 128>}, {transform_indices = @transform_4, window_bounds = array<i64: 64, 4>}, {pipeline_mode = #tpu.pipeline_mode<synchronous>, transform_indices = @transform_5, window_bounds = array<i64: 4, 128>}, {pipeline_mode = #tpu.pipeline_mode<synchronous>, transform_indices = @transform_6, window_bounds = array<i64: 1, 128>}, {pipeline_mode = #tpu.pipeline_mode<synchronous>, transform_indices = @transform_7, window_bounds = array<i64: 1, 128>}, {transform_indices = @transform_8, window_bounds = array<i64: 64, 128>}]} {
    %c0 = arith.constant 0 : index
    %c0_0 = arith.constant 0 : index
    %0 = vector.load %arg1[%c0, %c0_0] : memref<64x72xbf16, #tpu.memory_space<vmem>>, vector<64x72xbf16>
    %c0_1 = arith.constant 0 : index
    %c0_2 = arith.constant 0 : index
    %1 = vector.load %arg2[%c0_1, %c0_2] : memref<72x128xbf16, #tpu.memory_space<vmem>>, vector<72x128xbf16>
    %cst = arith.constant dense<0.000000e+00> : vector<64x128xf32>
    %2 = tpu.matmul %0, %1, %cst {dimension_numbers = #tpu.dot_dimension_numbers<[1], [0], [0], [1], [0, 0, 1, 1], [], []>} : vector<64x72xbf16>, vector<72x128xbf16>, vector<64x128xf32> -> vector<64x128xf32>
    %c0_3 = arith.constant 0 : index
    %c0_4 = arith.constant 0 : index
    %3 = vector.load %arg3[%c0_3, %c0_4] : memref<1x128xf32, #tpu.memory_space<vmem>>, vector<1x128xf32>
    %4 = vector.broadcast %3 : vector<1x128xf32> to vector<64x128xf32>
    %5 = arith.mulf %2, %4 : vector<64x128xf32>
    %c0_5 = arith.constant 0 : index
    %c0_6 = arith.constant 0 : index
    %6 = vector.load %arg4[%c0_5, %c0_6] : memref<1x128xf32, #tpu.memory_space<vmem>>, vector<1x128xf32>
    %7 = vector.broadcast %6 : vector<1x128xf32> to vector<64x128xf32>
    %8 = arith.addf %5, %7 : vector<64x128xf32>
    %c0_7 = arith.constant 0 : index
    %c0_8 = arith.constant 0 : index
    %9 = vector.load %arg5[%c0_7, %c0_8] : memref<64x4xbf16, #tpu.memory_space<vmem>>, vector<64x4xbf16>
    %c0_9 = arith.constant 0 : index
    %c0_10 = arith.constant 0 : index
    %10 = vector.load %arg6[%c0_9, %c0_10] : memref<4x128xbf16, #tpu.memory_space<vmem>>, vector<4x128xbf16>
    %cst_11 = arith.constant dense<0.000000e+00> : vector<64x128xf32>
    %11 = tpu.matmul %9, %10, %cst_11 {dimension_numbers = #tpu.dot_dimension_numbers<[1], [0], [0], [1], [0, 0, 1, 1], [], []>} : vector<64x4xbf16>, vector<4x128xbf16>, vector<64x128xf32> -> vector<64x128xf32>
    %c0_12 = arith.constant 0 : index
    %c0_13 = arith.constant 0 : index
    %12 = vector.load %arg7[%c0_12, %c0_13] : memref<1x128xf32, #tpu.memory_space<vmem>>, vector<1x128xf32>
    %13 = vector.broadcast %12 : vector<1x128xf32> to vector<64x128xf32>
    %14 = arith.mulf %11, %13 : vector<64x128xf32>
    %15 = arith.addf %8, %14 : vector<64x128xf32>
    %c0_14 = arith.constant 0 : index
    %c0_15 = arith.constant 0 : index
    %16 = vector.load %arg8[%c0_14, %c0_15] : memref<1x128xf32, #tpu.memory_space<vmem>>, vector<1x128xf32>
    %17 = vector.broadcast %16 : vector<1x128xf32> to vector<64x128xf32>
    %18 = arith.addf %15, %17 : vector<64x128xf32>
    %cst_16 = arith.constant 0.000000e+00 : f32
    %19 = vector.broadcast %cst_16 : f32 to vector<64x128xf32>
    %20 = arith.maximumf %18, %19 : vector<64x128xf32>
    %c0_17 = arith.constant 0 : index
    %c0_18 = arith.constant 0 : index
    %21 = vector.load %arg9[%c0_17, %c0_18] : memref<64x128xf32, #tpu.memory_space<vmem>>, vector<64x128xf32>
    tpu.vector_store %arg9[%c0_17, %c0_18], %20 {strides = array<i32>} : memref<64x128xf32, #tpu.memory_space<vmem>>, vector<64x128xf32>,
    return
  }
  func.func @transform_0(%arg0: i32) -> (i32, i32) {
    %c0_i32 = arith.constant 0 : i32
    %c0_i32_0 = arith.constant 0 : i32
    return %arg0, %c0_i32 : i32, i32
  }
  func.func @transform_1(%arg0: i32) -> (i32, i32) {
    %c0_i32 = arith.constant 0 : i32
    %c0_i32_0 = arith.constant 0 : i32
    %c0_i32_1 = arith.constant 0 : i32
    return %c0_i32, %c0_i32_0 : i32, i32
  }
  func.func @transform_2(%arg0: i32) -> (i32, i32) {
    %c0_i32 = arith.constant 0 : i32
    %c0_i32_0 = arith.constant 0 : i32
    %c0_i32_1 = arith.constant 0 : i32
    return %c0_i32, %c0_i32_0 : i32, i32
  }
  func.func @transform_3(%arg0: i32) -> (i32, i32) {
    %c0_i32 = arith.constant 0 : i32
    %c0_i32_0 = arith.constant 0 : i32
    %c0_i32_1 = arith.constant 0 : i32
    return %c0_i32, %c0_i32_0 : i32, i32
  }
  func.func @transform_4(%arg0: i32) -> (i32, i32) {
    %c0_i32 = arith.constant 0 : i32
    %c0_i32_0 = arith.constant 0 : i32
    return %arg0, %c0_i32 : i32, i32
  }
  func.func @transform_5(%arg0: i32) -> (i32, i32) {
    %c0_i32 = arith.constant 0 : i32
    %c0_i32_0 = arith.constant 0 : i32
    %c0_i32_1 = arith.constant 0 : i32
    return %c0_i32, %c0_i32_0 : i32, i32
  }
  func.func @transform_6(%arg0: i32) -> (i32, i32) {
    %c0_i32 = arith.constant 0 : i32
    %c0_i32_0 = arith.constant 0 : i32
    %c0_i32_1 = arith.constant 0 : i32
    return %c0_i32, %c0_i32_0 : i32, i32
  }
  func.func @transform_7(%arg0: i32) -> (i32, i32) {
    %c0_i32 = arith.constant 0 : i32
    %c0_i32_0 = arith.constant 0 : i32
    %c0_i32_1 = arith.constant 0 : i32
    return %c0_i32, %c0_i32_0 : i32, i32
  }
  func.func @transform_8(%arg0: i32) -> (i32, i32) {
    %c0_i32 = arith.constant 0 : i32
    %c0_i32_0 = arith.constant 0 : i32
    return %arg0, %c0_i32 : i32, i32
  }
}

</mosaic_0001>

<llo_original>
// kernel: basic_block_forward.4
$region0: #{basic_block_forward.4}
  #allocation0 [shape = 'u32[]', space=smem, size = 0x4, offset = 0x4, fixed_abs, tag = 'smem constant byte address 0x4 - core index']
  #allocation1 [shape = 'u32[144,128]{1,0:T(1,128)}', space=vmem, size = 0x12000, scoped, tag = 'internal scratch']
  %s0 = inlined_call_operand.vmem [shape: bf16[128,36], index: 0, kind: input, shape index: {}]
  %s1 = inlined_call_operand.vmem [shape: bf16[36,128], index: 1, kind: input, shape index: {}]
  %s2 = inlined_call_operand.vmem [shape: f32[2,2,128], index: 2, kind: output, shape index: {}]
  %s3 = sld [smem:[#allocation0]]
  $region41: #{basic_block_forward.4} parent=0
    _
  %s5 = ssub.s32 1, %s3
  %s6 = scalar_select 0, %s5, %s3
  loop: start=0, step=1, limit=4
  $region2: #{basic_block_forward.4} parent=0 // loop_pre_header
    _
  $region3: #{basic_block_forward.4} parent=0 // loop_header
    %s8 = sphi 0, %s12
    %p9 = scmp.ge.s32.totalorder %s8, 4
    %s18 = sphi 0, %s20
    %s21 = sphi 0, %s18
    %s22 = sphi 0, %s21
    %s38 = sphi 0, %s22
    %s42 = sphi 0, %s42
    %s44 = sphi 0, %s42
    %s45 = sphi 0, %s44
    %s59 = sphi 0, %s45
    %s65 = sphi 0, %s67
    %s68 = sphi 0, %s65
    %s69 = sphi 0, %s68
    %s85 = sphi 0, %s69
  $region4: #{basic_block_forward.4} parent=0 // loop_header_branch
    %11 = sbr.rel (%p9) target = $region8
  $region5: #{basic_block_forward.4} parent=0 // loop_body
    %s13 = ssub.s32 %s8, 1
    %s14 = ssub.s32 %s8, 2
    %s15 = sadd.s32 %s8, 1
    %s16 = ssub.s32 %s8, %s15
    %p17 = scmp.eq.s32.totalorder %s16, 0
    %s19 = sadd.s32 %s18, 1
    %s20 = scalar_select %p17, %s18, %s19
    %p23 = pneg %p17
    %p24 = scmp.eq.s32.totalorder %s8, 1
    %p25 = por %p23, %p24
    %p26 = scmp.ne.s32.totalorder %s18, %s21
    %p27 = scmp.eq.s32.totalorder %s8, 0
    %p28 = por %p26, %p27
    %p29 = scmp.ne.s32.totalorder %s18, %s21
    %p30 = scmp.eq.s32.totalorder %s13, 1
    %p31 = por %p29, %p30
    %p32 = scmp.ne.s32.totalorder %s21, %s22
    %p33 = scmp.eq.s32.totalorder %s13, 0
    %p34 = por %p32, %p33
    %p35 = scmp.ne.s32.totalorder %s21, %s22
    %p36 = scmp.eq.s32.totalorder %s14, 1
    %p37 = por %p35, %p36
    %p39 = scmp.ne.s32.totalorder %s22, %s38
    %p40 = scmp.eq.s32.totalorder %s14, 0
    %p41 = por %p39, %p40
    %s43 = sadd.s32 %s42, 1
    %p46 = scmp.eq.s32.totalorder %s8, 1
    %p47 = scmp.ne.s32.totalorder %s42, %s44
    %p48 = scmp.eq.s32.totalorder %s8, 0
    %p49 = por %p47, %p48
    %p50 = scmp.ne.s32.totalorder %s42, %s44
    %p51 = scmp.eq.s32.totalorder %s13, 1
    %p52 = por %p50, %p51
    %p53 = scmp.ne.s32.totalorder %s44, %s45
    %p54 = scmp.eq.s32.totalorder %s13, 0
    %p55 = por %p53, %p54
    %p56 = scmp.ne.s32.totalorder %s44, %s45
    %p57 = scmp.eq.s32.totalorder %s14, 1
    %p58 = por %p56, %p57
    %p60 = scmp.ne.s32.totalorder %s45, %s59
    %p61 = scmp.eq.s32.totalorder %s14, 0
    %p62 = por %p60, %p61
    %s63 = ssub.s32 %s8, %s15
    %p64 = scmp.eq.s32.totalorder %s63, 0
    %s66 = sadd.s32 %s65, 1
    %s67 = scalar_select %p64, %s65, %s66
    %p70 = pneg %p64
    %p71 = scmp.eq.s32.totalorder %s8, 1
    %p72 = por %p70, %p71
    %p73 = scmp.ne.s32.totalorder %s65, %s68
    %p74 = scmp.eq.s32.totalorder %s8, 0
    %p75 = por %p73, %p74
    %p76 = scmp.ne.s32.totalorder %s65, %s68
    %p77 = scmp.eq.s32.totalorder %s13, 1
    %p78 = por %p76, %p77
    %p79 = scmp.ne.s32.totalorder %s68, %s69
    %p80 = scmp.eq.s32.totalorder %s13, 0
    %p81 = por %p79, %p80
    %p82 = scmp.ne.s32.totalorder %s68, %s69
    %p83 = scmp.eq.s32.totalorder %s14, 1
    %p84 = por %p82, %p83
    %p86 = scmp.ne.s32.totalorder %s69, %s85
    %p87 = scmp.eq.s32.totalorder %s14, 0
    %p88 = por %p86, %p87
    %p89 = scmp.le.s32.totalorder 1, %s8
    %p90 = scmp.lt.s32.totalorder %s8, 3
    %p91 = pnand %p89, %p90
    %p92 = pneg %p91
    // Predicated region
    $region9: #{basic_block_forward.4} parent=5 // pred_check
      _
    $region10: #{basic_block_forward.4} parent=5 // pred_check_branch
      %94 = sbr.rel (%p91) target = $region12
    $region11: #{basic_block_forward.4} parent=5 // pred_region
      %s95 = ssub.s32 %s8, 1
      // Predicated region
      $region13: #{basic_block_forward.4} parent=11 // pred_check
        %p96 = pneg %p55
      $region14: #{basic_block_forward.4} parent=11 // pred_check_branch
        %98 = sbr.rel (%p96) target = $region16
      $region15: #{basic_block_forward.4} parent=11 // pred_region
        _
      $region16: #{basic_block_forward.4} parent=11 // pred_fallthru
        _
    $region12: #{basic_block_forward.4} parent=5 // pred_fallthru
      _
    %p99 = scmp.lt.s32.totalorder %s8, 2
    // Predicated region
    $region17: #{basic_block_forward.4} parent=5 // pred_check
      %p100 = pneg %p99
    $region18: #{basic_block_forward.4} parent=5 // pred_check_branch
      %102 = sbr.rel (%p100) target = $region20
    $region19: #{basic_block_forward.4} parent=5 // pred_region
      // Predicated region
      $region21: #{basic_block_forward.4} parent=19 // pred_check
        %p103 = pneg %p28
      $region22: #{basic_block_forward.4} parent=19 // pred_check_branch
        %105 = sbr.rel (%p103) target = $region24
      $region23: #{basic_block_forward.4} parent=19 // pred_region
        %s106 = smul.u32 8, %s8
        %p107 = scmp.lt.s32.totalorder %s106, 15
        %s108 = scalar_select %p107, %s106, 15
        %s109 = smul.addr %s108, 4
        %s110 = scalar_lea.vmem %s0, %s109
        %s111 = smul.u32 8, %s8
      $region24: #{basic_block_forward.4} parent=19 // pred_fallthru
        _
    $region20: #{basic_block_forward.4} parent=5 // pred_fallthru
      _
    %p112 = scmp.le.s32.totalorder 1, %s8
    %p113 = scmp.lt.s32.totalorder %s8, 3
    %p114 = pnand %p112, %p113
    %p115 = pneg %p114
    // Predicated region
    $region25: #{basic_block_forward.4} parent=5 // pred_check
      _
    $region26: #{basic_block_forward.4} parent=5 // pred_check_branch
      %117 = sbr.rel (%p114) target = $region28
    $region27: #{basic_block_forward.4} parent=5 // pred_region
      %s118 = ssub.s32 %s8, 1
      %s119 = smul.u32 8, %s13
      %p120 = scmp.lt.s32.totalorder %s119, 15
      %s121 = scalar_select %p120, %s119, 15
      %s122 = smul.addr %s121, 4
      %s123 = scalar_lea.vmem %s0, %s122
      %p124 = pneg %p34
      %p125 = pneg %p31
      %p126 = pneg %p55
      %p127 = pneg %p52
      %p128 = pneg %p81
      %p129 = pneg %p78
      %p130 = scmp.lt.s32.totalorder %s13, 1
      %s131 = scalar_select %p130, %s13, 1
      %s132 = smul.addr %s131, 2
      %s133 = scalar_lea.vmem %s2, %s132
      %s134 = smul.u32 8, %s13
      %p135 = scmp.lt.s32.totalorder %s134, 15
      %s136 = scalar_select %p135, %s134, 15
      %s137 = smul.addr %s136, 4
      %s138 = scalar_lea.vmem %s0, %s137
      %s139 = smul.u32 8, %s13
      %p140 = scmp.lt.s32.totalorder %s13, 1
      %s141 = scalar_select %p140, %s13, 1
      %s142 = smul.addr %s141, 2
      %s143 = scalar_lea.vmem %s2, %s142
      %v145 = vld [vmem:[%s138] sm:$0xf]
      %v146 = vld [vmem:[%s138 + $0x4] sm:$0xf]
      %v147 = vld [vmem:[%s138 + $0x8] sm:$0xf]
      %v148 = vld [vmem:[%s138 + $0xc] sm:$0xf]
      %v149 = vld [vmem:[%s138 + $0x10] sm:$0xf]
      %v150 = vld [vmem:[%s138 + $0x14] sm:$0xf]
      %v151 = vld [vmem:[%s138 + $0x18] sm:$0xf]
      %v152 = vld [vmem:[%s138 + $0x1c] sm:$0xf]
      %v153 = vld [vmem:[%s1] sm:$0xf]
      %v154 = vld [vmem:[%s1 + $0x4] sm:$0xf]
      %v155 = vld [vmem:[%s1 + $0x8] sm:$0xf]
      %v156 = vld [vmem:[%s1 + $0xc] sm:$0xf]
      %v157 = vld [vmem:[%s1 + $0x10] sm:$0x3]
      %v166 = vunpack.c.l.b16 %v145
      %v167 = vunpack.c.l.b16 %v146
      %v168 = vunpack.c.l.b16 %v147
      %v169 = vunpack.c.l.b16 %v148
      %v170 = vunpack.c.l.b16 %v149
      %v171 = vunpack.c.l.b16 %v150
      %v172 = vunpack.c.l.b16 %v151
      %v173 = vunpack.c.l.b16 %v152
      %v174 = vpack.c.b16 %v167, %v166
      %v175 = vpack.c.b16 %v169, %v168
      %v176 = vpack.c.b16 %v171, %v170
      %v177 = vpack.c.b16 %v173, %v172
      %v183 = vunpack.c.l.b16 %v153
      %v184 = vunpack.c.l.b16 %v154
      %v185 = vunpack.c.l.b16 %v155
      %v186 = vunpack.c.l.b16 %v156
      %v187 = vunpack.c.l.b16 %v157
      %v188 = vpack.c.b16 %v184, %v183
      %v189 = vpack.c.b16 %v186, %v185
      %v190 = vpack.c.b16 %v187, %v187
      %vm193 = vcmask 293888
      %v195 = vsel %vm193, %v174, 0
      %v198 = vsel %vm193, %v175, 0
      %v201 = vsel %vm193, %v176, 0
      %v204 = vsel %vm193, %v177, 0
      %vm206 = vcmask 1041408
      %v208 = vsel %vm206, %v190, 0
      %210 = vmatprep.subr.bf16.mxu0 0
      %211 = vmatpush1.bf16.msra.mxu0 %v188
      %212 = vmatprep.subr.bf16.mxu0 0
      %213 = vmatpush1.bf16.msra.mxu0 %v189
      %214 = vmatprep.subr.bf16.mxu0 0
      %215 = vmatpush1.bf16.msra.mxu0 %v208
      %216 = vmatprep.subr.bf16.mxu0 0
      %217 = vmatpush1.bf16.msra.mxu0 0
      %218 = vmatprep.subr.bf16.mxu0 0
      %219 = vmatpush1.bf16.msra.mxu0 0
      %220 = vmatprep.subr.bf16.mxu0 0
      %221 = vmatpush1.bf16.msra.mxu0 0
      %222 = vmatprep.subr.bf16.mxu0 0
      %223 = vmatpush1.bf16.msra.mxu0 0
      %224 = vmatprep.subr.bf16.mxu0 0
      %225 = vmatpush1.bf16.msra.mxu0 0
      %226 = vmatprep.subr.bf16.mxu0 0
      %227 = vmatpush1.bf16.msra.mxu0 0
      %228 = vmatprep.subr.bf16.mxu0 0
      %229 = vmatpush1.bf16.msra.mxu0 0
      %230 = vmatprep.subr.bf16.mxu0 0
      %231 = vmatpush1.bf16.msra.mxu0 0
      %232 = vmatprep.subr.bf16.mxu0 0
      %233 = vmatpush1.bf16.msra.mxu0 0
      %234 = vmatprep.subr.bf16.mxu0 0
      %235 = vmatpush1.bf16.msra.mxu0 0
      %236 = vmatprep.subr.bf16.mxu0 0
      %237 = vmatpush1.bf16.msra.mxu0 0
      %238 = vmatprep.subr.bf16.mxu0 0
      %239 = vmatpush1.bf16.msra.mxu0 0
      %240 = vmatprep.subr.bf16.mxu0 0
      %241 = vmatpush1.bf16.msra.mxu0 0
      %242 = vmatprep.mubr.bf16.mxu0 0
      %243 = vmatmul.mubr.bf16.gmra.mrb[0].mxu0 %v195
      %v244 = vpop.f32.mrb[0].mxu0
      %v245 = vadd.f32 0.0, %v244
      %v246 = vpop.f32.mrb[0].mxu0
      %v247 = vpop.f32.mrb[0].mxu0
      %v248 = vadd.f32 0.0, %v247
      %v249 = vpop.f32.mrb[0].mxu0
      %250 = vmatprep.mubr.bf16.mxu0 0
      %251 = vmatmul.mubr.bf16.gmra.mrb[0].mxu0 %v198
      %v252 = vpop.f32.mrb[0].mxu0
      %v253 = vadd.f32 0.0, %v252
      %v254 = vpop.f32.mrb[0].mxu0
      %v255 = vpop.f32.mrb[0].mxu0
      %v256 = vadd.f32 0.0, %v255
      %v257 = vpop.f32.mrb[0].mxu0
      %258 = vmatprep.mubr.bf16.mxu0 0
      %259 = vmatmul.mubr.bf16.gmra.mrb[0].mxu0 %v201
      %v260 = vpop.f32.mrb[0].mxu0
      %v261 = vadd.f32 0.0, %v260
      %v262 = vpop.f32.mrb[0].mxu0
      %v263 = vpop.f32.mrb[0].mxu0
      %v264 = vadd.f32 0.0, %v263
      %v265 = vpop.f32.mrb[0].mxu0
      %266 = vmatprep.mubr.bf16.mxu0 0
      %267 = vmatmul.mubr.bf16.gmra.mrb[0].mxu0 %v204
      %v268 = vpop.f32.mrb[0].mxu0
      %v269 = vadd.f32 0.0, %v268
      %v270 = vpop.f32.mrb[0].mxu0
      %v271 = vpop.f32.mrb[0].mxu0
      %v272 = vadd.f32 0.0, %v271
      %v273 = vpop.f32.mrb[0].mxu0
      %274 = vdwg.mxu0
      %v275 = vadd.f32 %v245, %v248
      %v276 = vadd.f32 %v275, %v253
      %v277 = vadd.f32 %v276, %v256
      %v278 = vadd.f32 %v277, %v261
      %v279 = vadd.f32 %v278, %v264
      %v280 = vadd.f32 %v279, %v269
      %v281 = vadd.f32 %v280, %v272
      %v282 = vrot.slane %v281, 4
      %v283 = vadd.f32 %v281, %v282
      %v284 = vrot.slane %v283, 2
      %v285 = vadd.f32 %v283, %v284
      %v286 = vrot.slane %v285, 1
      %v287 = vadd.f32 %v285, %v286
      %v288 = vmul.f32 %v245, %v245
      %v289 = vmul.f32 %v248, %v248
      %v290 = vmul.f32 %v253, %v253
      %v291 = vmul.f32 %v256, %v256
      %v292 = vmul.f32 %v261, %v261
      %v293 = vmul.f32 %v264, %v264
      %v294 = vmul.f32 %v269, %v269
      %v295 = vmul.f32 %v272, %v272
      %v296 = vadd.f32 %v288, %v289
      %v297 = vadd.f32 %v296, %v290
      %v298 = vadd.f32 %v297, %v291
      %v299 = vadd.f32 %v298, %v292
      %v300 = vadd.f32 %v299, %v293
      %v301 = vadd.f32 %v300, %v294
      %v302 = vadd.f32 %v301, %v295
      %v303 = vrot.slane %v302, 4
      %v304 = vadd.f32 %v302, %v303
      %v305 = vrot.slane %v304, 2
      %v306 = vadd.f32 %v304, %v305
      %v307 = vrot.slane %v306, 1
      %v308 = vadd.f32 %v306, %v307
      %vm309 = vcmask 1040384
      %v310 = vsel %vm309, %v287, %v308
      %311 = vst [vmem:[%s143] sm:$0x3] %v310
      %p312 = scmp.lt.s32.totalorder %s13, 1
      %s313 = scalar_select %p312, %s13, 1
      %s314 = smul.addr %s313, 2
      %s315 = scalar_lea.vmem %s2, %s314
      // Predicated region
      $region29: #{basic_block_forward.4} parent=27 // pred_check
        %p316 = pneg %p78
      $region30: #{basic_block_forward.4} parent=27 // pred_check_branch
        %318 = sbr.rel (%p316) target = $region32
      $region31: #{basic_block_forward.4} parent=27 // pred_region
        _
      $region32: #{basic_block_forward.4} parent=27 // pred_fallthru
        _
    $region28: #{basic_block_forward.4} parent=5 // pred_fallthru
      _
    %p319 = scmp.le.s32.totalorder 2, %s8
    // Predicated region
    $region33: #{basic_block_forward.4} parent=5 // pred_check
      %p320 = pneg %p319
    $region34: #{basic_block_forward.4} parent=5 // pred_check_branch
      %322 = sbr.rel (%p320) target = $region36
    $region35: #{basic_block_forward.4} parent=5 // pred_region
      %s323 = ssub.s32 %s8, 2
      // Predicated region
      $region37: #{basic_block_forward.4} parent=35 // pred_check
        %p324 = pneg %p84
      $region38: #{basic_block_forward.4} parent=35 // pred_check_branch
        %326 = sbr.rel (%p324) target = $region40
      $region39: #{basic_block_forward.4} parent=35 // pred_region
        %p327 = scmp.lt.s32.totalorder %s14, 1
        %s328 = scalar_select %p327, %s14, 1
        %s329 = smul.addr %s328, 2
        %s330 = scalar_lea.vmem %s2, %s329
      $region40: #{basic_block_forward.4} parent=35 // pred_fallthru
        _
    $region36: #{basic_block_forward.4} parent=5 // pred_fallthru
      _
  $region6: #{basic_block_forward.4} parent=0 // loop_footer
    %s12 = sadd.s32 1, %s8
  $region7: #{basic_block_forward.4} parent=0 // loop_footer_branch
    %7 = sbr.rel target = $region3
  $region8: #{basic_block_forward.4} parent=0 // loop_exit
    _

// kernel: basic_block_forward.5
$region0: #{basic_block_forward.5}
  #allocation0 [shape = 'u32[]', space=smem, size = 0x4, offset = 0x4, fixed_abs, tag = 'smem constant byte address 0x4 - core index']
  #allocation1 [shape = 'u32[144,128]{1,0:T(1,128)}', space=vmem, size = 0x12000, scoped, tag = 'internal scratch']
  %s0 = inlined_call_operand.vmem [shape: bf16[128,36], index: 0, kind: input, shape index: {}]
  %s1 = inlined_call_operand.vmem [shape: bf16[36,128], index: 1, kind: input, shape index: {}]
  %s2 = inlined_call_operand.vmem [shape: f32[1,128], index: 2, kind: input, shape index: {}]
  %s3 = inlined_call_operand.vmem [shape: f32[1,128], index: 3, kind: input, shape index: {}]
  %s4 = inlined_call_operand.vmem [shape: bf16[128,128], index: 4, kind: output, shape index: {}]
  %s5 = sld [smem:[#allocation0]]
  $region49: #{basic_block_forward.5} parent=0
    _
  %s7 = ssub.s32 1, %s5
  %s8 = scalar_select 0, %s7, %s5
  loop: start=0, step=1, limit=4
  $region2: #{basic_block_forward.5} parent=0 // loop_pre_header
    _
  $region3: #{basic_block_forward.5} parent=0 // loop_header
    %s10 = sphi 0, %s14
    %p11 = scmp.ge.s32.totalorder %s10, 4
    %s20 = sphi 0, %s22
    %s23 = sphi 0, %s20
    %s24 = sphi 0, %s23
    %s40 = sphi 0, %s24
    %s44 = sphi 0, %s44
    %s46 = sphi 0, %s44
    %s47 = sphi 0, %s46
    %s61 = sphi 0, %s47
    %s65 = sphi 0, %s65
    %s67 = sphi 0, %s65
    %s68 = sphi 0, %s67
    %s82 = sphi 0, %s68
    %s86 = sphi 0, %s86
    %s88 = sphi 0, %s86
    %s89 = sphi 0, %s88
    %s103 = sphi 0, %s89
    %s109 = sphi 0, %s111
    %s112 = sphi 0, %s109
    %s113 = sphi 0, %s112
    %s129 = sphi 0, %s113
  $region4: #{basic_block_forward.5} parent=0 // loop_header_branch
    %13 = sbr.rel (%p11) target = $region8
  $region5: #{basic_block_forward.5} parent=0 // loop_body
    %s15 = ssub.s32 %s10, 1
    %s16 = ssub.s32 %s10, 2
    %s17 = sadd.s32 %s10, 1
    %s18 = ssub.s32 %s10, %s17
    %p19 = scmp.eq.s32.totalorder %s18, 0
    %s21 = sadd.s32 %s20, 1
    %s22 = scalar_select %p19, %s20, %s21
    %p25 = pneg %p19
    %p26 = scmp.eq.s32.totalorder %s10, 1
    %p27 = por %p25, %p26
    %p28 = scmp.ne.s32.totalorder %s20, %s23
    %p29 = scmp.eq.s32.totalorder %s10, 0
    %p30 = por %p28, %p29
    %p31 = scmp.ne.s32.totalorder %s20, %s23
    %p32 = scmp.eq.s32.totalorder %s15, 1
    %p33 = por %p31, %p32
    %p34 = scmp.ne.s32.totalorder %s23, %s24
    %p35 = scmp.eq.s32.totalorder %s15, 0
    %p36 = por %p34, %p35
    %p37 = scmp.ne.s32.totalorder %s23, %s24
    %p38 = scmp.eq.s32.totalorder %s16, 1
    %p39 = por %p37, %p38
    %p41 = scmp.ne.s32.totalorder %s24, %s40
    %p42 = scmp.eq.s32.totalorder %s16, 0
    %p43 = por %p41, %p42
    %s45 = sadd.s32 %s44, 1
    %p48 = scmp.eq.s32.totalorder %s10, 1
    %p49 = scmp.ne.s32.totalorder %s44, %s46
    %p50 = scmp.eq.s32.totalorder %s10, 0
    %p51 = por %p49, %p50
    %p52 = scmp.ne.s32.totalorder %s44, %s46
    %p53 = scmp.eq.s32.totalorder %s15, 1
    %p54 = por %p52, %p53
    %p55 = scmp.ne.s32.totalorder %s46, %s47
    %p56 = scmp.eq.s32.totalorder %s15, 0
    %p57 = por %p55, %p56
    %p58 = scmp.ne.s32.totalorder %s46, %s47
    %p59 = scmp.eq.s32.totalorder %s16, 1
    %p60 = por %p58, %p59
    %p62 = scmp.ne.s32.totalorder %s47, %s61
    %p63 = scmp.eq.s32.totalorder %s16, 0
    %p64 = por %p62, %p63
    %s66 = sadd.s32 %s65, 1
    %p69 = scmp.eq.s32.totalorder %s10, 1
    %p70 = scmp.ne.s32.totalorder %s65, %s67
    %p71 = scmp.eq.s32.totalorder %s10, 0
    %p72 = por %p70, %p71
    %p73 = scmp.ne.s32.totalorder %s65, %s67
    %p74 = scmp.eq.s32.totalorder %s15, 1
    %p75 = por %p73, %p74
    %p76 = scmp.ne.s32.totalorder %s67, %s68
    %p77 = scmp.eq.s32.totalorder %s15, 0
    %p78 = por %p76, %p77
    %p79 = scmp.ne.s32.totalorder %s67, %s68
    %p80 = scmp.eq.s32.totalorder %s16, 1
    %p81 = por %p79, %p80
    %p83 = scmp.ne.s32.totalorder %s68, %s82
    %p84 = scmp.eq.s32.totalorder %s16, 0
    %p85 = por %p83, %p84
    %s87 = sadd.s32 %s86, 1
    %p90 = scmp.eq.s32.totalorder %s10, 1
    %p91 = scmp.ne.s32.totalorder %s86, %s88
    %p92 = scmp.eq.s32.totalorder %s10, 0
    %p93 = por %p91, %p92
    %p94 = scmp.ne.s32.totalorder %s86, %s88
    %p95 = scmp.eq.s32.totalorder %s15, 1
    %p96 = por %p94, %p95
    %p97 = scmp.ne.s32.totalorder %s88, %s89
    %p98 = scmp.eq.s32.totalorder %s15, 0
    %p99 = por %p97, %p98
    %p100 = scmp.ne.s32.totalorder %s88, %s89
    %p101 = scmp.eq.s32.totalorder %s16, 1
    %p102 = por %p100, %p101
    %p104 = scmp.ne.s32.totalorder %s89, %s103
    %p105 = scmp.eq.s32.totalorder %s16, 0
    %p106 = por %p104, %p105
    %s107 = ssub.s32 %s10, %s17
    %p108 = scmp.eq.s32.totalorder %s107, 0
    %s110 = sadd.s32 %s109, 1
    %s111 = scalar_select %p108, %s109, %s110
    %p114 = pneg %p108
    %p115 = scmp.eq.s32.totalorder %s10, 1
    %p116 = por %p114, %p115
    %p117 = scmp.ne.s32.totalorder %s109, %s112
    %p118 = scmp.eq.s32.totalorder %s10, 0
    %p119 = por %p117, %p118
    %p120 = scmp.ne.s32.totalorder %s109, %s112
    %p121 = scmp.eq.s32.totalorder %s15, 1
    %p122 = por %p120, %p121
    %p123 = scmp.ne.s32.totalorder %s112, %s113
    %p124 = scmp.eq.s32.totalorder %s15, 0
    %p125 = por %p123, %p124
    %p126 = scmp.ne.s32.totalorder %s112, %s113
    %p127 = scmp.eq.s32.totalorder %s16, 1
    %p128 = por %p126, %p127
    %p130 = scmp.ne.s32.totalorder %s113, %s129
    %p131 = scmp.eq.s32.totalorder %s16, 0
    %p132 = por %p130, %p131
    %p133 = scmp.le.s32.totalorder 1, %s10
    %p134 = scmp.lt.s32.totalorder %s10, 3
    %p135 = pnand %p133, %p134
    %p136 = pneg %p135
    // Predicated region
    $region9: #{basic_block_forward.5} parent=5 // pred_check
      _
    $region10: #{basic_block_forward.5} parent=5 // pred_check_branch
      %138 = sbr.rel (%p135) target = $region12
    $region11: #{basic_block_forward.5} parent=5 // pred_region
      %s139 = ssub.s32 %s10, 1
      // Predicated region
      $region13: #{basic_block_forward.5} parent=11 // pred_check
        %p140 = pneg %p57
      $region14: #{basic_block_forward.5} parent=11 // pred_check_branch
        %142 = sbr.rel (%p140) target = $region16
      $region15: #{basic_block_forward.5} parent=11 // pred_region
        _
      $region16: #{basic_block_forward.5} parent=11 // pred_fallthru
        _
      // Predicated region
      $region17: #{basic_block_forward.5} parent=11 // pred_check
        %p143 = pneg %p78
      $region18: #{basic_block_forward.5} parent=11 // pred_check_branch
        %145 = sbr.rel (%p143) target = $region20
      $region19: #{basic_block_forward.5} parent=11 // pred_region
        _
      $region20: #{basic_block_forward.5} parent=11 // pred_fallthru
        _
      // Predicated region
      $region21: #{basic_block_forward.5} parent=11 // pred_check
        %p146 = pneg %p99
      $region22: #{basic_block_forward.5} parent=11 // pred_check_branch
        %148 = sbr.rel (%p146) target = $region24
      $region23: #{basic_block_forward.5} parent=11 // pred_region
        _
      $region24: #{basic_block_forward.5} parent=11 // pred_fallthru
        _
    $region12: #{basic_block_forward.5} parent=5 // pred_fallthru
      _
    %p149 = scmp.lt.s32.totalorder %s10, 2
    // Predicated region
    $region25: #{basic_block_forward.5} parent=5 // pred_check
      %p150 = pneg %p149
    $region26: #{basic_block_forward.5} parent=5 // pred_check_branch
      %152 = sbr.rel (%p150) target = $region28
    $region27: #{basic_block_forward.5} parent=5 // pred_region
      // Predicated region
      $region29: #{basic_block_forward.5} parent=27 // pred_check
        %p153 = pneg %p30
      $region30: #{basic_block_forward.5} parent=27 // pred_check_branch
        %155 = sbr.rel (%p153) target = $region32
      $region31: #{basic_block_forward.5} parent=27 // pred_region
        %s156 = smul.u32 8, %s10
        %p157 = scmp.lt.s32.totalorder %s156, 15
        %s158 = scalar_select %p157, %s156, 15
        %s159 = smul.addr %s158, 4
        %s160 = scalar_lea.vmem %s0, %s159
        %s161 = smul.u32 8, %s10
      $region32: #{basic_block_forward.5} parent=27 // pred_fallthru
        _
    $region28: #{basic_block_forward.5} parent=5 // pred_fallthru
      _
    %p162 = scmp.le.s32.totalorder 1, %s10
    %p163 = scmp.lt.s32.totalorder %s10, 3
    %p164 = pnand %p162, %p163
    %p165 = pneg %p164
    // Predicated region
    $region33: #{basic_block_forward.5} parent=5 // pred_check
      _
    $region34: #{basic_block_forward.5} parent=5 // pred_check_branch
      %167 = sbr.rel (%p164) target = $region36
    $region35: #{basic_block_forward.5} parent=5 // pred_region
      %s168 = ssub.s32 %s10, 1
      %s169 = smul.u32 8, %s15
      %p170 = scmp.lt.s32.totalorder %s169, 15
      %s171 = scalar_select %p170, %s169, 15
      %s172 = smul.addr %s171, 4
      %s173 = scalar_lea.vmem %s0, %s172
      %p174 = pneg %p36
      %p175 = pneg %p33
      %p176 = pneg %p57
      %p177 = pneg %p54
      %p178 = pneg %p78
      %p179 = pneg %p75
      %p180 = pneg %p99
      %p181 = pneg %p96
      %p182 = pneg %p125
      %p183 = pneg %p122
      %s184 = smul.u32 8, %s15
      %p185 = scmp.lt.s32.totalorder %s184, 15
      %s186 = scalar_select %p185, %s184, 15
      %s187 = smul.addr %s186, 4
      %s188 = scalar_lea.vmem %s4, %s187
      %s189 = smul.u32 8, %s15
      %p190 = scmp.lt.s32.totalorder %s189, 15
      %s191 = scalar_select %p190, %s189, 15
      %s192 = smul.addr %s191, 4
      %s193 = scalar_lea.vmem %s0, %s192
      %s194 = smul.u32 8, %s15
      %s195 = smul.u32 8, %s15
      %p196 = scmp.lt.s32.totalorder %s195, 15
      %s197 = scalar_select %p196, %s195, 15
      %s198 = smul.addr %s197, 4
      %s199 = scalar_lea.vmem %s4, %s198
      %s200 = smul.u32 8, %s15
      %v202 = vld [vmem:[%s193] sm:$0xf]
      %v203 = vld [vmem:[%s193 + $0x4] sm:$0xf]
      %v204 = vld [vmem:[%s193 + $0x8] sm:$0xf]
      %v205 = vld [vmem:[%s193 + $0xc] sm:$0xf]
      %v206 = vld [vmem:[%s193 + $0x10] sm:$0xf]
      %v207 = vld [vmem:[%s193 + $0x14] sm:$0xf]
      %v208 = vld [vmem:[%s193 + $0x18] sm:$0xf]
      %v209 = vld [vmem:[%s193 + $0x1c] sm:$0xf]
      %v210 = vld [vmem:[%s1] sm:$0xf]
      %v211 = vld [vmem:[%s1 + $0x4] sm:$0xf]
      %v212 = vld [vmem:[%s1 + $0x8] sm:$0xf]
      %v213 = vld [vmem:[%s1 + $0xc] sm:$0xf]
      %v214 = vld [vmem:[%s1 + $0x10] sm:$0x3]
      %v223 = vunpack.c.l.b16 %v202
      %v224 = vunpack.c.l.b16 %v203
      %v225 = vunpack.c.l.b16 %v204
      %v226 = vunpack.c.l.b16 %v205
      %v227 = vunpack.c.l.b16 %v206
      %v228 = vunpack.c.l.b16 %v207
      %v229 = vunpack.c.l.b16 %v208
      %v230 = vunpack.c.l.b16 %v209
      %v231 = vpack.c.b16 %v224, %v223
      %v232 = vpack.c.b16 %v226, %v225
      %v233 = vpack.c.b16 %v228, %v227
      %v234 = vpack.c.b16 %v230, %v229
      %v240 = vunpack.c.l.b16 %v210
      %v241 = vunpack.c.l.b16 %v211
      %v242 = vunpack.c.l.b16 %v212
      %v243 = vunpack.c.l.b16 %v213
      %v244 = vunpack.c.l.b16 %v214
      %v245 = vpack.c.b16 %v241, %v240
      %v246 = vpack.c.b16 %v243, %v242
      %v247 = vpack.c.b16 %v244, %v244
      %vm250 = vcmask 293888
      %v252 = vsel %vm250, %v231, 0
      %v255 = vsel %vm250, %v232, 0
      %v258 = vsel %vm250, %v233, 0
      %v261 = vsel %vm250, %v234, 0
      %vm263 = vcmask 1041408
      %v265 = vsel %vm263, %v247, 0
      %267 = vmatprep.subr.bf16.mxu0 0
      %268 = vmatpush1.bf16.msra.mxu0 %v245
      %269 = vmatprep.subr.bf16.mxu0 0
      %270 = vmatpush1.bf16.msra.mxu0 %v246
      %271 = vmatprep.subr.bf16.mxu0 0
      %272 = vmatpush1.bf16.msra.mxu0 %v265
      %273 = vmatprep.subr.bf16.mxu0 0
      %274 = vmatpush1.bf16.msra.mxu0 0
      %275 = vmatprep.subr.bf16.mxu0 0
      %276 = vmatpush1.bf16.msra.mxu0 0
      %277 = vmatprep.subr.bf16.mxu0 0
      %278 = vmatpush1.bf16.msra.mxu0 0
      %279 = vmatprep.subr.bf16.mxu0 0
      %280 = vmatpush1.bf16.msra.mxu0 0
      %281 = vmatprep.subr.bf16.mxu0 0
      %282 = vmatpush1.bf16.msra.mxu0 0
      %283 = vmatprep.subr.bf16.mxu0 0
      %284 = vmatpush1.bf16.msra.mxu0 0
      %285 = vmatprep.subr.bf16.mxu0 0
      %286 = vmatpush1.bf16.msra.mxu0 0
      %287 = vmatprep.subr.bf16.mxu0 0
      %288 = vmatpush1.bf16.msra.mxu0 0
      %289 = vmatprep.subr.bf16.mxu0 0
      %290 = vmatpush1.bf16.msra.mxu0 0
      %291 = vmatprep.subr.bf16.mxu0 0
      %292 = vmatpush1.bf16.msra.mxu0 0
      %293 = vmatprep.subr.bf16.mxu0 0
      %294 = vmatpush1.bf16.msra.mxu0 0
      %295 = vmatprep.subr.bf16.mxu0 0
      %296 = vmatpush1.bf16.msra.mxu0 0
      %297 = vmatprep.subr.bf16.mxu0 0
      %298 = vmatpush1.bf16.msra.mxu0 0
      %299 = vmatprep.mubr.bf16.mxu0 0
      %300 = vmatmul.mubr.bf16.gmra.mrb[0].mxu0 %v252
      %v301 = vpop.f32.mrb[0].mxu0
      %v302 = vadd.f32 0.0, %v301
      %v303 = vpop.f32.mrb[0].mxu0
      %v304 = vpop.f32.mrb[0].mxu0
      %v305 = vadd.f32 0.0, %v304
      %v306 = vpop.f32.mrb[0].mxu0
      %307 = vmatprep.mubr.bf16.mxu0 0
      %308 = vmatmul.mubr.bf16.gmra.mrb[0].mxu0 %v255
      %v309 = vpop.f32.mrb[0].mxu0
      %v310 = vadd.f32 0.0, %v309
      %v311 = vpop.f32.mrb[0].mxu0
      %v312 = vpop.f32.mrb[0].mxu0
      %v313 = vadd.f32 0.0, %v312
      %v314 = vpop.f32.mrb[0].mxu0
      %315 = vmatprep.mubr.bf16.mxu0 0
      %316 = vmatmul.mubr.bf16.gmra.mrb[0].mxu0 %v258
      %v317 = vpop.f32.mrb[0].mxu0
      %v318 = vadd.f32 0.0, %v317
      %v319 = vpop.f32.mrb[0].mxu0
      %v320 = vpop.f32.mrb[0].mxu0
      %v321 = vadd.f32 0.0, %v320
      %v322 = vpop.f32.mrb[0].mxu0
      %323 = vmatprep.mubr.bf16.mxu0 0
      %324 = vmatmul.mubr.bf16.gmra.mrb[0].mxu0 %v261
      %v325 = vpop.f32.mrb[0].mxu0
      %v326 = vadd.f32 0.0, %v325
      %v327 = vpop.f32.mrb[0].mxu0
      %v328 = vpop.f32.mrb[0].mxu0
      %v329 = vadd.f32 0.0, %v328
      %v330 = vpop.f32.mrb[0].mxu0
      %331 = vdwg.mxu0
      %v332 = vld [vmem:[%s2] sm:$0x1]
      %v334 = vlaneseq
      %v335 = vshrl.u32 %v334, 7
      %v336 = vsub.s32 0, %v335
      %v337 = vrot.slane %v332, %v336
      %v339 = vmul.f32 %v302, %v337
      %v340 = vmul.f32 %v305, %v337
      %v341 = vmul.f32 %v310, %v337
      %v342 = vmul.f32 %v313, %v337
      %v343 = vmul.f32 %v318, %v337
      %v344 = vmul.f32 %v321, %v337
      %v345 = vmul.f32 %v326, %v337
      %v346 = vmul.f32 %v329, %v337
      %v347 = vld [vmem:[%s3] sm:$0x1]
      %v349 = vlaneseq
      %v350 = vshrl.u32 %v349, 7
      %v351 = vsub.s32 0, %v350
      %v352 = vrot.slane %v347, %v351
      %v354 = vadd.f32 %v339, %v352
      %v355 = vadd.f32 %v340, %v352
      %v356 = vadd.f32 %v341, %v352
      %v357 = vadd.f32 %v342, %v352
      %v358 = vadd.f32 %v343, %v352
      %v359 = vadd.f32 %v344, %v352
      %v360 = vadd.f32 %v345, %v352
      %v361 = vadd.f32 %v346, %v352
      %v362 = vmax.f32 %v354, 0.0
      %v363 = vmax.f32 %v355, 0.0
      %v364 = vmax.f32 %v356, 0.0
      %v365 = vmax.f32 %v357, 0.0
      %v366 = vmax.f32 %v358, 0.0
      %v367 = vmax.f32 %v359, 0.0
      %v368 = vmax.f32 %v360, 0.0
      %v369 = vmax.f32 %v361, 0.0
      %v370 = vpack.c.bf16 %v363, %v362
      %v371 = vpack.c.bf16 %v365, %v364
      %v372 = vpack.c.bf16 %v367, %v366
      %v373 = vpack.c.bf16 %v369, %v368
      %v378 = vunpack.c.l.b16 %v370
      %v379 = vunpack.c.h.b16 %v370
      %v380 = vunpack.c.l.b16 %v371
      %v381 = vunpack.c.h.b16 %v371
      %v382 = vunpack.c.l.b16 %v372
      %v383 = vunpack.c.h.b16 %v372
      %v384 = vunpack.c.l.b16 %v373
      %v385 = vunpack.c.h.b16 %v373
      %v386 = vpack.c.b16 %v378, %v378
      %v387 = vpack.c.b16 %v379, %v379
      %v388 = vpack.c.b16 %v380, %v380
      %v389 = vpack.c.b16 %v381, %v381
      %v390 = vpack.c.b16 %v382, %v382
      %v391 = vpack.c.b16 %v383, %v383
      %v392 = vpack.c.b16 %v384, %v384
      %v393 = vpack.c.b16 %v385, %v385
      %402 = vst [vmem:[%s199] sm:$0xf] %v386
      %403 = vst [vmem:[%s199 + $0x4] sm:$0xf] %v387
      %404 = vst [vmem:[%s199 + $0x8] sm:$0xf] %v388
      %405 = vst [vmem:[%s199 + $0xc] sm:$0xf] %v389
      %406 = vst [vmem:[%s199 + $0x10] sm:$0xf] %v390
      %407 = vst [vmem:[%s199 + $0x14] sm:$0xf] %v391
      %408 = vst [vmem:[%s199 + $0x18] sm:$0xf] %v392
      %409 = vst [vmem:[%s199 + $0x1c] sm:$0xf] %v393
      %s410 = smul.u32 8, %s15
      %p411 = scmp.lt.s32.totalorder %s410, 15
      %s412 = scalar_select %p411, %s410, 15
      %s413 = smul.addr %s412, 4
      %s414 = scalar_lea.vmem %s4, %s413
      // Predicated region
      $region37: #{basic_block_forward.5} parent=35 // pred_check
        %p415 = pneg %p122
      $region38: #{basic_block_forward.5} parent=35 // pred_check_branch
        %417 = sbr.rel (%p415) target = $region40
      $region39: #{basic_block_forward.5} parent=35 // pred_region
        %s418 = smul.u32 8, %s15
      $region40: #{basic_block_forward.5} parent=35 // pred_fallthru
        _
    $region36: #{basic_block_forward.5} parent=5 // pred_fallthru
      _
    %p419 = scmp.le.s32.totalorder 2, %s10
    // Predicated region
    $region41: #{basic_block_forward.5} parent=5 // pred_check
      %p420 = pneg %p419
    $region42: #{basic_block_forward.5} parent=5 // pred_check_branch
      %422 = sbr.rel (%p420) target = $region44
    $region43: #{basic_block_forward.5} parent=5 // pred_region
      %s423 = ssub.s32 %s10, 2
      // Predicated region
      $region45: #{basic_block_forward.5} parent=43 // pred_check
        %p424 = pneg %p128
      $region46: #{basic_block_forward.5} parent=43 // pred_check_branch
        %426 = sbr.rel (%p424) target = $region48
      $region47: #{basic_block_forward.5} parent=43 // pred_region
        %s427 = smul.u32 8, %s16
        %p428 = scmp.lt.s32.totalorder %s427, 15
        %s429 = scalar_select %p428, %s427, 15
        %s430 = smul.addr %s429, 4
        %s431 = scalar_lea.vmem %s4, %s430
      $region48: #{basic_block_forward.5} parent=43 // pred_fallthru
        _
    $region44: #{basic_block_forward.5} parent=5 // pred_fallthru
      _
  $region6: #{basic_block_forward.5} parent=0 // loop_footer
    %s14 = sadd.s32 1, %s10
  $region7: #{basic_block_forward.5} parent=0 // loop_footer_branch
    %9 = sbr.rel target = $region3
  $region8: #{basic_block_forward.5} parent=0 // loop_exit
    _

// kernel: basic_block_forward.6
$region0: #{basic_block_forward.6}
  #allocation0 [shape = 'u32[]', space=smem, size = 0x4, offset = 0x4, fixed_abs, tag = 'smem constant byte address 0x4 - core index']
  #allocation1 [shape = 'u32[144,128]{1,0:T(1,128)}', space=vmem, size = 0x12000, scoped, tag = 'internal scratch']
  %s0 = inlined_call_operand.vmem [shape: bf16[128,72], index: 0, kind: input, shape index: {}]
  %s1 = inlined_call_operand.vmem [shape: bf16[72,128], index: 1, kind: input, shape index: {}]
  %s2 = inlined_call_operand.vmem [shape: bf16[128,4], index: 2, kind: input, shape index: {}]
  %s3 = inlined_call_operand.vmem [shape: bf16[4,128], index: 3, kind: input, shape index: {}]
  %s4 = inlined_call_operand.vmem [shape: f32[2,4,128], index: 4, kind: output, shape index: {}]
  %s5 = sld [smem:[#allocation0]]
  $region49: #{basic_block_forward.6} parent=0
    _
  %s7 = ssub.s32 1, %s5
  %s8 = scalar_select 0, %s7, %s5
  loop: start=0, step=1, limit=4
  $region2: #{basic_block_forward.6} parent=0 // loop_pre_header
    _
  $region3: #{basic_block_forward.6} parent=0 // loop_header
    %s10 = sphi 0, %s14
    %p11 = scmp.ge.s32.totalorder %s10, 4
    %s20 = sphi 0, %s22
    %s23 = sphi 0, %s20
    %s24 = sphi 0, %s23
    %s40 = sphi 0, %s24
    %s44 = sphi 0, %s44
    %s46 = sphi 0, %s44
    %s47 = sphi 0, %s46
    %s61 = sphi 0, %s47
    %s67 = sphi 0, %s69
    %s70 = sphi 0, %s67
    %s71 = sphi 0, %s70
    %s87 = sphi 0, %s71
    %s91 = sphi 0, %s91
    %s93 = sphi 0, %s91
    %s94 = sphi 0, %s93
    %s108 = sphi 0, %s94
    %s114 = sphi 0, %s116
    %s117 = sphi 0, %s114
    %s118 = sphi 0, %s117
    %s134 = sphi 0, %s118
  $region4: #{basic_block_forward.6} parent=0 // loop_header_branch
    %13 = sbr.rel (%p11) target = $region8
  $region5: #{basic_block_forward.6} parent=0 // loop_body
    %s15 = ssub.s32 %s10, 1
    %s16 = ssub.s32 %s10, 2
    %s17 = sadd.s32 %s10, 1
    %s18 = ssub.s32 %s10, %s17
    %p19 = scmp.eq.s32.totalorder %s18, 0
    %s21 = sadd.s32 %s20, 1
    %s22 = scalar_select %p19, %s20, %s21
    %p25 = pneg %p19
    %p26 = scmp.eq.s32.totalorder %s10, 1
    %p27 = por %p25, %p26
    %p28 = scmp.ne.s32.totalorder %s20, %s23
    %p29 = scmp.eq.s32.totalorder %s10, 0
    %p30 = por %p28, %p29
    %p31 = scmp.ne.s32.totalorder %s20, %s23
    %p32 = scmp.eq.s32.totalorder %s15, 1
    %p33 = por %p31, %p32
    %p34 = scmp.ne.s32.totalorder %s23, %s24
    %p35 = scmp.eq.s32.totalorder %s15, 0
    %p36 = por %p34, %p35
    %p37 = scmp.ne.s32.totalorder %s23, %s24
    %p38 = scmp.eq.s32.totalorder %s16, 1
    %p39 = por %p37, %p38
    %p41 = scmp.ne.s32.totalorder %s24, %s40
    %p42 = scmp.eq.s32.totalorder %s16, 0
    %p43 = por %p41, %p42
    %s45 = sadd.s32 %s44, 1
    %p48 = scmp.eq.s32.totalorder %s10, 1
    %p49 = scmp.ne.s32.totalorder %s44, %s46
    %p50 = scmp.eq.s32.totalorder %s10, 0
    %p51 = por %p49, %p50
    %p52 = scmp.ne.s32.totalorder %s44, %s46
    %p53 = scmp.eq.s32.totalorder %s15, 1
    %p54 = por %p52, %p53
    %p55 = scmp.ne.s32.totalorder %s46, %s47
    %p56 = scmp.eq.s32.totalorder %s15, 0
    %p57 = por %p55, %p56
    %p58 = scmp.ne.s32.totalorder %s46, %s47
    %p59 = scmp.eq.s32.totalorder %s16, 1
    %p60 = por %p58, %p59
    %p62 = scmp.ne.s32.totalorder %s47, %s61
    %p63 = scmp.eq.s32.totalorder %s16, 0
    %p64 = por %p62, %p63
    %s65 = ssub.s32 %s10, %s17
    %p66 = scmp.eq.s32.totalorder %s65, 0
    %s68 = sadd.s32 %s67, 1
    %s69 = scalar_select %p66, %s67, %s68
    %p72 = pneg %p66
    %p73 = scmp.eq.s32.totalorder %s10, 1
    %p74 = por %p72, %p73
    %p75 = scmp.ne.s32.totalorder %s67, %s70
    %p76 = scmp.eq.s32.totalorder %s10, 0
    %p77 = por %p75, %p76
    %p78 = scmp.ne.s32.totalorder %s67, %s70
    %p79 = scmp.eq.s32.totalorder %s15, 1
    %p80 = por %p78, %p79
    %p81 = scmp.ne.s32.totalorder %s70, %s71
    %p82 = scmp.eq.s32.totalorder %s15, 0
    %p83 = por %p81, %p82
    %p84 = scmp.ne.s32.totalorder %s70, %s71
    %p85 = scmp.eq.s32.totalorder %s16, 1
    %p86 = por %p84, %p85
    %p88 = scmp.ne.s32.totalorder %s71, %s87
    %p89 = scmp.eq.s32.totalorder %s16, 0
    %p90 = por %p88, %p89
    %s92 = sadd.s32 %s91, 1
    %p95 = scmp.eq.s32.totalorder %s10, 1
    %p96 = scmp.ne.s32.totalorder %s91, %s93
    %p97 = scmp.eq.s32.totalorder %s10, 0
    %p98 = por %p96, %p97
    %p99 = scmp.ne.s32.totalorder %s91, %s93
    %p100 = scmp.eq.s32.totalorder %s15, 1
    %p101 = por %p99, %p100
    %p102 = scmp.ne.s32.totalorder %s93, %s94
    %p103 = scmp.eq.s32.totalorder %s15, 0
    %p104 = por %p102, %p103
    %p105 = scmp.ne.s32.totalorder %s93, %s94
    %p106 = scmp.eq.s32.totalorder %s16, 1
    %p107 = por %p105, %p106
    %p109 = scmp.ne.s32.totalorder %s94, %s108
    %p110 = scmp.eq.s32.totalorder %s16, 0
    %p111 = por %p109, %p110
    %s112 = ssub.s32 %s10, %s17
    %p113 = scmp.eq.s32.totalorder %s112, 0
    %s115 = sadd.s32 %s114, 1
    %s116 = scalar_select %p113, %s114, %s115
    %p119 = pneg %p113
    %p120 = scmp.eq.s32.totalorder %s10, 1
    %p121 = por %p119, %p120
    %p122 = scmp.ne.s32.totalorder %s114, %s117
    %p123 = scmp.eq.s32.totalorder %s10, 0
    %p124 = por %p122, %p123
    %p125 = scmp.ne.s32.totalorder %s114, %s117
    %p126 = scmp.eq.s32.totalorder %s15, 1
    %p127 = por %p125, %p126
    %p128 = scmp.ne.s32.totalorder %s117, %s118
    %p129 = scmp.eq.s32.totalorder %s15, 0
    %p130 = por %p128, %p129
    %p131 = scmp.ne.s32.totalorder %s117, %s118
    %p132 = scmp.eq.s32.totalorder %s16, 1
    %p133 = por %p131, %p132
    %p135 = scmp.ne.s32.totalorder %s118, %s134
    %p136 = scmp.eq.s32.totalorder %s16, 0
    %p137 = por %p135, %p136
    %p138 = scmp.le.s32.totalorder 1, %s10
    %p139 = scmp.lt.s32.totalorder %s10, 3
    %p140 = pnand %p138, %p139
    %p141 = pneg %p140
    // Predicated region
    $region9: #{basic_block_forward.6} parent=5 // pred_check
      _
    $region10: #{basic_block_forward.6} parent=5 // pred_check_branch
      %143 = sbr.rel (%p140) target = $region12
    $region11: #{basic_block_forward.6} parent=5 // pred_region
      %s144 = ssub.s32 %s10, 1
      // Predicated region
      $region13: #{basic_block_forward.6} parent=11 // pred_check
        %p145 = pneg %p57
      $region14: #{basic_block_forward.6} parent=11 // pred_check_branch
        %147 = sbr.rel (%p145) target = $region16
      $region15: #{basic_block_forward.6} parent=11 // pred_region
        _
      $region16: #{basic_block_forward.6} parent=11 // pred_fallthru
        _
      // Predicated region
      $region17: #{basic_block_forward.6} parent=11 // pred_check
        %p148 = pneg %p104
      $region18: #{basic_block_forward.6} parent=11 // pred_check_branch
        %150 = sbr.rel (%p148) target = $region20
      $region19: #{basic_block_forward.6} parent=11 // pred_region
        _
      $region20: #{basic_block_forward.6} parent=11 // pred_fallthru
        _
    $region12: #{basic_block_forward.6} parent=5 // pred_fallthru
      _
    %p151 = scmp.lt.s32.totalorder %s10, 2
    // Predicated region
    $region21: #{basic_block_forward.6} parent=5 // pred_check
      %p152 = pneg %p151
    $region22: #{basic_block_forward.6} parent=5 // pred_check_branch
      %154 = sbr.rel (%p152) target = $region24
    $region23: #{basic_block_forward.6} parent=5 // pred_region
      // Predicated region
      $region25: #{basic_block_forward.6} parent=23 // pred_check
        %p155 = pneg %p30
      $region26: #{basic_block_forward.6} parent=23 // pred_check_branch
        %157 = sbr.rel (%p155) target = $region28
      $region27: #{basic_block_forward.6} parent=23 // pred_region
        %s158 = smul.u32 8, %s10
        %p159 = scmp.lt.s32.totalorder %s158, 15
        %s160 = scalar_select %p159, %s158, 15
        %s161 = smul.addr %s160, 4
        %s162 = scalar_lea.vmem %s0, %s161
        %s163 = smul.u32 8, %s10
      $region28: #{basic_block_forward.6} parent=23 // pred_fallthru
        _
      // Predicated region
      $region29: #{basic_block_forward.6} parent=23 // pred_check
        %p164 = pneg %p77
      $region30: #{basic_block_forward.6} parent=23 // pred_check_branch
        %166 = sbr.rel (%p164) target = $region32
      $region31: #{basic_block_forward.6} parent=23 // pred_region
        %s167 = smul.u32 8, %s10
        %p168 = scmp.lt.s32.totalorder %s167, 15
        %s169 = scalar_select %p168, %s167, 15
        %s170 = smul.addr %s169, 4
        %s171 = scalar_lea.vmem %s2, %s170
        %s172 = smul.u32 8, %s10
      $region32: #{basic_block_forward.6} parent=23 // pred_fallthru
        _
    $region24: #{basic_block_forward.6} parent=5 // pred_fallthru
      _
    %p173 = scmp.le.s32.totalorder 1, %s10
    %p174 = scmp.lt.s32.totalorder %s10, 3
    %p175 = pnand %p173, %p174
    %p176 = pneg %p175
    // Predicated region
    $region33: #{basic_block_forward.6} parent=5 // pred_check
      _
    $region34: #{basic_block_forward.6} parent=5 // pred_check_branch
      %178 = sbr.rel (%p175) target = $region36
    $region35: #{basic_block_forward.6} parent=5 // pred_region
      %s179 = ssub.s32 %s10, 1
      %s180 = smul.u32 8, %s15
      %p181 = scmp.lt.s32.totalorder %s180, 15
      %s182 = scalar_select %p181, %s180, 15
      %s183 = smul.addr %s182, 4
      %s184 = scalar_lea.vmem %s0, %s183
      %p185 = pneg %p36
      %p186 = pneg %p33
      %p187 = pneg %p57
      %p188 = pneg %p54
      %s189 = smul.u32 8, %s15
      %p190 = scmp.lt.s32.totalorder %s189, 15
      %s191 = scalar_select %p190, %s189, 15
      %s192 = smul.addr %s191, 4
      %s193 = scalar_lea.vmem %s2, %s192
      %p194 = pneg %p83
      %p195 = pneg %p80
      %p196 = pneg %p104
      %p197 = pneg %p101
      %p198 = pneg %p130
      %p199 = pneg %p127
      %p200 = scmp.lt.s32.totalorder %s15, 1
      %s201 = scalar_select %p200, %s15, 1
      %s202 = smul.addr %s201, 4
      %s203 = scalar_lea.vmem %s4, %s202
      %s204 = smul.u32 8, %s15
      %p205 = scmp.lt.s32.totalorder %s204, 15
      %s206 = scalar_select %p205, %s204, 15
      %s207 = smul.addr %s206, 4
      %s208 = scalar_lea.vmem %s0, %s207
      %s209 = smul.u32 8, %s15
      %s210 = smul.u32 8, %s15
      %p211 = scmp.lt.s32.totalorder %s210, 15
      %s212 = scalar_select %p211, %s210, 15
      %s213 = smul.addr %s212, 4
      %s214 = scalar_lea.vmem %s2, %s213
      %s215 = smul.u32 8, %s15
      %p216 = scmp.lt.s32.totalorder %s15, 1
      %s217 = scalar_select %p216, %s15, 1
      %s218 = smul.addr %s217, 4
      %s219 = scalar_lea.vmem %s4, %s218
      %v221 = vld [vmem:[%s208] sm:$0xf]
      %v222 = vld [vmem:[%s208 + $0x4] sm:$0xf]
      %v223 = vld [vmem:[%s208 + $0x8] sm:$0xf]
      %v224 = vld [vmem:[%s208 + $0xc] sm:$0xf]
      %v225 = vld [vmem:[%s208 + $0x10] sm:$0xf]
      %v226 = vld [vmem:[%s208 + $0x14] sm:$0xf]
      %v227 = vld [vmem:[%s208 + $0x18] sm:$0xf]
      %v228 = vld [vmem:[%s208 + $0x1c] sm:$0xf]
      %v229 = vld [vmem:[%s1] sm:$0xf]
      %v230 = vld [vmem:[%s1 + $0x4] sm:$0xf]
      %v231 = vld [vmem:[%s1 + $0x8] sm:$0xf]
      %v232 = vld [vmem:[%s1 + $0xc] sm:$0xf]
      %v233 = vld [vmem:[%s1 + $0x10] sm:$0xf]
      %v234 = vld [vmem:[%s1 + $0x14] sm:$0xf]
      %v235 = vld [vmem:[%s1 + $0x18] sm:$0xf]
      %v236 = vld [vmem:[%s1 + $0x1c] sm:$0xf]
      %v237 = vld [vmem:[%s1 + $0x20] sm:$0xf]
      %v246 = vunpack.c.l.b16 %v221
      %v247 = vunpack.c.l.b16 %v222
      %v248 = vunpack.c.l.b16 %v223
      %v249 = vunpack.c.l.b16 %v224
      %v250 = vunpack.c.l.b16 %v225
      %v251 = vunpack.c.l.b16 %v226
      %v252 = vunpack.c.l.b16 %v227
      %v253 = vunpack.c.l.b16 %v228
      %v254 = vpack.c.b16 %v247, %v246
      %v255 = vpack.c.b16 %v249, %v248
      %v256 = vpack.c.b16 %v251, %v250
      %v257 = vpack.c.b16 %v253, %v252
      %v267 = vunpack.c.l.b16 %v229
      %v268 = vunpack.c.l.b16 %v230
      %v269 = vunpack.c.l.b16 %v231
      %v270 = vunpack.c.l.b16 %v232
      %v271 = vunpack.c.l.b16 %v233
      %v272 = vunpack.c.l.b16 %v234
      %v273 = vunpack.c.l.b16 %v235
      %v274 = vunpack.c.l.b16 %v236
      %v275 = vunpack.c.l.b16 %v237
      %v276 = vpack.c.b16 %v268, %v267
      %v277 = vpack.c.b16 %v270, %v269
      %v278 = vpack.c.b16 %v272, %v271
      %v279 = vpack.c.b16 %v274, %v273
      %v280 = vpack.c.b16 %v275, %v275
      %vm285 = vcmask 588800
      %v287 = vsel %vm285, %v254, 0
      %v290 = vsel %vm285, %v255, 0
      %v293 = vsel %vm285, %v256, 0
      %v296 = vsel %vm285, %v257, 0
      %vm298 = vcmask 1043456
      %v300 = vsel %vm298, %v280, 0
      %302 = vmatprep.subr.bf16.mxu0 0
      %303 = vmatpush1.bf16.msra.mxu0 %v276
      %304 = vmatprep.subr.bf16.mxu0 0
      %305 = vmatpush1.bf16.msra.mxu0 %v277
      %306 = vmatprep.subr.bf16.mxu0 0
      %307 = vmatpush1.bf16.msra.mxu0 %v278
      %308 = vmatprep.subr.bf16.mxu0 0
      %309 = vmatpush1.bf16.msra.mxu0 %v279
      %310 = vmatprep.subr.bf16.mxu0 0
      %311 = vmatpush1.bf16.msra.mxu0 %v300
      %312 = vmatprep.subr.bf16.mxu0 0
      %313 = vmatpush1.bf16.msra.mxu0 0
      %314 = vmatprep.subr.bf16.mxu0 0
      %315 = vmatpush1.bf16.msra.mxu0 0
      %316 = vmatprep.subr.bf16.mxu0 0
      %317 = vmatpush1.bf16.msra.mxu0 0
      %318 = vmatprep.subr.bf16.mxu0 0
      %319 = vmatpush1.bf16.msra.mxu0 0
      %320 = vmatprep.subr.bf16.mxu0 0
      %321 = vmatpush1.bf16.msra.mxu0 0
      %322 = vmatprep.subr.bf16.mxu0 0
      %323 = vmatpush1.bf16.msra.mxu0 0
      %324 = vmatprep.subr.bf16.mxu0 0
      %325 = vmatpush1.bf16.msra.mxu0 0
      %326 = vmatprep.subr.bf16.mxu0 0
      %327 = vmatpush1.bf16.msra.mxu0 0
      %328 = vmatprep.subr.bf16.mxu0 0
      %329 = vmatpush1.bf16.msra.mxu0 0
      %330 = vmatprep.subr.bf16.mxu0 0
      %331 = vmatpush1.bf16.msra.mxu0 0
      %332 = vmatprep.subr.bf16.mxu0 0
      %333 = vmatpush1.bf16.msra.mxu0 0
      %334 = vmatprep.mubr.bf16.mxu0 0
      %335 = vmatmul.mubr.bf16.gmra.mrb[0].mxu0 %v287
      %v336 = vpop.f32.mrb[0].mxu0
      %v337 = vadd.f32 0.0, %v336
      %v338 = vpop.f32.mrb[0].mxu0
      %v339 = vpop.f32.mrb[0].mxu0
      %v340 = vadd.f32 0.0, %v339
      %v341 = vpop.f32.mrb[0].mxu0
      %342 = vmatprep.mubr.bf16.mxu0 0
      %343 = vmatmul.mubr.bf16.gmra.mrb[0].mxu0 %v290
      %v344 = vpop.f32.mrb[0].mxu0
      %v345 = vadd.f32 0.0, %v344
      %v346 = vpop.f32.mrb[0].mxu0
      %v347 = vpop.f32.mrb[0].mxu0
      %v348 = vadd.f32 0.0, %v347
      %v349 = vpop.f32.mrb[0].mxu0
      %350 = vmatprep.mubr.bf16.mxu0 0
      %351 = vmatmul.mubr.bf16.gmra.mrb[0].mxu0 %v293
      %v352 = vpop.f32.mrb[0].mxu0
      %v353 = vadd.f32 0.0, %v352
      %v354 = vpop.f32.mrb[0].mxu0
      %v355 = vpop.f32.mrb[0].mxu0
      %v356 = vadd.f32 0.0, %v355
      %v357 = vpop.f32.mrb[0].mxu0
      %358 = vmatprep.mubr.bf16.mxu0 0
      %359 = vmatmul.mubr.bf16.gmra.mrb[0].mxu0 %v296
      %v360 = vpop.f32.mrb[0].mxu0
      %v361 = vadd.f32 0.0, %v360
      %v362 = vpop.f32.mrb[0].mxu0
      %v363 = vpop.f32.mrb[0].mxu0
      %v364 = vadd.f32 0.0, %v363
      %v365 = vpop.f32.mrb[0].mxu0
      %366 = vdwg.mxu0
      %v367 = vld [vmem:[%s214] sm:$0xf]
      %v368 = vld [vmem:[%s214 + $0x4] sm:$0xf]
      %v369 = vld [vmem:[%s214 + $0x8] sm:$0xf]
      %v370 = vld [vmem:[%s214 + $0xc] sm:$0xf]
      %v371 = vld [vmem:[%s214 + $0x10] sm:$0xf]
      %v372 = vld [vmem:[%s214 + $0x14] sm:$0xf]
      %v373 = vld [vmem:[%s214 + $0x18] sm:$0xf]
      %v374 = vld [vmem:[%s214 + $0x1c] sm:$0xf]
      %v375 = vld [vmem:[%s3] sm:$0x3]
      %v384 = vunpack.c.l.b16 %v367
      %v385 = vunpack.c.l.b16 %v368
      %v386 = vunpack.c.l.b16 %v369
      %v387 = vunpack.c.l.b16 %v370
      %v388 = vunpack.c.l.b16 %v371
      %v389 = vunpack.c.l.b16 %v372
      %v390 = vunpack.c.l.b16 %v373
      %v391 = vunpack.c.l.b16 %v374
      %v392 = vpack.c.b16 %v385, %v384
      %v393 = vpack.c.b16 %v387, %v386
      %v394 = vpack.c.b16 %v389, %v388
      %v395 = vpack.c.b16 %v391, %v390
      %vm396 = vcmask 31744
      %v398 = vsel %vm396, %v392, 0
      %v401 = vsel %vm396, %v393, 0
      %v404 = vsel %vm396, %v394, 0
      %v407 = vsel %vm396, %v395, 0
      %vm409 = vcmask 1041408
      %v411 = vsel %vm409, %v375, 0
      %413 = vmatprep.subr.bf16.mxu0 0
      %414 = vmatpush1.bf16.msra.mxu0 %v411
      %415 = vmatprep.subr.bf16.mxu0 0
      %416 = vmatpush1.bf16.msra.mxu0 0
      %417 = vmatprep.subr.bf16.mxu0 0
      %418 = vmatpush1.bf16.msra.mxu0 0
      %419 = vmatprep.subr.bf16.mxu0 0
      %420 = vmatpush1.bf16.msra.mxu0 0
      %421 = vmatprep.subr.bf16.mxu0 0
      %422 = vmatpush1.bf16.msra.mxu0 0
      %423 = vmatprep.subr.bf16.mxu0 0
      %424 = vmatpush1.bf16.msra.mxu0 0
      %425 = vmatprep.subr.bf16.mxu0 0
      %426 = vmatpush1.bf16.msra.mxu0 0
      %427 = vmatprep.subr.bf16.mxu0 0
      %428 = vmatpush1.bf16.msra.mxu0 0
      %429 = vmatprep.subr.bf16.mxu0 0
      %430 = vmatpush1.bf16.msra.mxu0 0
      %431 = vmatprep.subr.bf16.mxu0 0
      %432 = vmatpush1.bf16.msra.mxu0 0
      %433 = vmatprep.subr.bf16.mxu0 0
      %434 = vmatpush1.bf16.msra.mxu0 0
      %435 = vmatprep.subr.bf16.mxu0 0
      %436 = vmatpush1.bf16.msra.mxu0 0
      %437 = vmatprep.subr.bf16.mxu0 0
      %438 = vmatpush1.bf16.msra.mxu0 0
      %439 = vmatprep.subr.bf16.mxu0 0
      %440 = vmatpush1.bf16.msra.mxu0 0
      %441 = vmatprep.subr.bf16.mxu0 0
      %442 = vmatpush1.bf16.msra.mxu0 0
      %443 = vmatprep.subr.bf16.mxu0 0
      %444 = vmatpush1.bf16.msra.mxu0 0
      %445 = vmatprep.mubr.bf16.mxu0 0
      %446 = vmatmul.mubr.bf16.gmra.mrb[0].mxu0 %v398
      %v447 = vpop.f32.mrb[0].mxu0
      %v448 = vadd.f32 0.0, %v447
      %v449 = vpop.f32.mrb[0].mxu0
      %v450 = vpop.f32.mrb[0].mxu0
      %v451 = vadd.f32 0.0, %v450
      %v452 = vpop.f32.mrb[0].mxu0
      %453 = vmatprep.mubr.bf16.mxu0 0
      %454 = vmatmul.mubr.bf16.gmra.mrb[0].mxu0 %v401
      %v455 = vpop.f32.mrb[0].mxu0
      %v456 = vadd.f32 0.0, %v455
      %v457 = vpop.f32.mrb[0].mxu0
      %v458 = vpop.f32.mrb[0].mxu0
      %v459 = vadd.f32 0.0, %v458
      %v460 = vpop.f32.mrb[0].mxu0
      %461 = vmatprep.mubr.bf16.mxu0 0
      %462 = vmatmul.mubr.bf16.gmra.mrb[0].mxu0 %v404
      %v463 = vpop.f32.mrb[0].mxu0
      %v464 = vadd.f32 0.0, %v463
      %v465 = vpop.f32.mrb[0].mxu0
      %v466 = vpop.f32.mrb[0].mxu0
      %v467 = vadd.f32 0.0, %v466
      %v468 = vpop.f32.mrb[0].mxu0
      %469 = vmatprep.mubr.bf16.mxu0 0
      %470 = vmatmul.mubr.bf16.gmra.mrb[0].mxu0 %v407
      %v471 = vpop.f32.mrb[0].mxu0
      %v472 = vadd.f32 0.0, %v471
      %v473 = vpop.f32.mrb[0].mxu0
      %v474 = vpop.f32.mrb[0].mxu0
      %v475 = vadd.f32 0.0, %v474
      %v476 = vpop.f32.mrb[0].mxu0
      %477 = vdwg.mxu0
      %v478 = vadd.f32 %v337, %v340
      %v479 = vadd.f32 %v478, %v345
      %v480 = vadd.f32 %v479, %v348
      %v481 = vadd.f32 %v480, %v353
      %v482 = vadd.f32 %v481, %v356
      %v483 = vadd.f32 %v482, %v361
      %v484 = vadd.f32 %v483, %v364
      %v485 = vrot.slane %v484, 4
      %v486 = vadd.f32 %v484, %v485
      %v487 = vrot.slane %v486, 2
      %v488 = vadd.f32 %v486, %v487
      %v489 = vrot.slane %v488, 1
      %v490 = vadd.f32 %v488, %v489
      %v491 = vmul.f32 %v337, %v337
      %v492 = vmul.f32 %v340, %v340
      %v493 = vmul.f32 %v345, %v345
      %v494 = vmul.f32 %v348, %v348
      %v495 = vmul.f32 %v353, %v353
      %v496 = vmul.f32 %v356, %v356
      %v497 = vmul.f32 %v361, %v361
      %v498 = vmul.f32 %v364, %v364
      %v499 = vadd.f32 %v491, %v492
      %v500 = vadd.f32 %v499, %v493
      %v501 = vadd.f32 %v500, %v494
      %v502 = vadd.f32 %v501, %v495
      %v503 = vadd.f32 %v502, %v496
      %v504 = vadd.f32 %v503, %v497
      %v505 = vadd.f32 %v504, %v498
      %v506 = vrot.slane %v505, 4
      %v507 = vadd.f32 %v505, %v506
      %v508 = vrot.slane %v507, 2
      %v509 = vadd.f32 %v507, %v508
      %v510 = vrot.slane %v509, 1
      %v511 = vadd.f32 %v509, %v510
      %v512 = vadd.f32 %v448, %v451
      %v513 = vadd.f32 %v512, %v456
      %v514 = vadd.f32 %v513, %v459
      %v515 = vadd.f32 %v514, %v464
      %v516 = vadd.f32 %v515, %v467
      %v517 = vadd.f32 %v516, %v472
      %v518 = vadd.f32 %v517, %v475
      %v519 = vrot.slane %v518, 4
      %v520 = vadd.f32 %v518, %v519
      %v521 = vrot.slane %v520, 2
      %v522 = vadd.f32 %v520, %v521
      %v523 = vrot.slane %v522, 1
      %v524 = vadd.f32 %v522, %v523
      %v525 = vmul.f32 %v448, %v448
      %v526 = vmul.f32 %v451, %v451
      %v527 = vmul.f32 %v456, %v456
      %v528 = vmul.f32 %v459, %v459
      %v529 = vmul.f32 %v464, %v464
      %v530 = vmul.f32 %v467, %v467
      %v531 = vmul.f32 %v472, %v472
      %v532 = vmul.f32 %v475, %v475
      %v533 = vadd.f32 %v525, %v526
      %v534 = vadd.f32 %v533, %v527
      %v535 = vadd.f32 %v534, %v528
      %v536 = vadd.f32 %v535, %v529
      %v537 = vadd.f32 %v536, %v530
      %v538 = vadd.f32 %v537, %v531
      %v539 = vadd.f32 %v538, %v532
      %v540 = vrot.slane %v539, 4
      %v541 = vadd.f32 %v539, %v540
      %v542 = vrot.slane %v541, 2
      %v543 = vadd.f32 %v541, %v542
      %v544 = vrot.slane %v543, 1
      %v545 = vadd.f32 %v543, %v544
      %vm546 = vcmask 1040384
      %v547 = vsel %vm546, %v490, %v511
      %v548 = vsel %vm409, %v547, %v524
      %vm549 = vcmask 1042432
      %v550 = vsel %vm549, %v548, %v545
      %551 = vst [vmem:[%s219] sm:$0xf] %v550
      %p552 = scmp.lt.s32.totalorder %s15, 1
      %s553 = scalar_select %p552, %s15, 1
      %s554 = smul.addr %s553, 4
      %s555 = scalar_lea.vmem %s4, %s554
      // Predicated region
      $region37: #{basic_block_forward.6} parent=35 // pred_check
        %p556 = pneg %p127
      $region38: #{basic_block_forward.6} parent=35 // pred_check_branch
        %558 = sbr.rel (%p556) target = $region40
      $region39: #{basic_block_forward.6} parent=35 // pred_region
        _
      $region40: #{basic_block_forward.6} parent=35 // pred_fallthru
        _
    $region36: #{basic_block_forward.6} parent=5 // pred_fallthru
      _
    %p559 = scmp.le.s32.totalorder 2, %s10
    // Predicated region
    $region41: #{basic_block_forward.6} parent=5 // pred_check
      %p560 = pneg %p559
    $region42: #{basic_block_forward.6} parent=5 // pred_check_branch
      %562 = sbr.rel (%p560) target = $region44
    $region43: #{basic_block_forward.6} parent=5 // pred_region
      %s563 = ssub.s32 %s10, 2
      // Predicated region
      $region45: #{basic_block_forward.6} parent=43 // pred_check
        %p564 = pneg %p133
      $region46: #{basic_block_forward.6} parent=43 // pred_check_branch
        %566 = sbr.rel (%p564) target = $region48
      $region47: #{basic_block_forward.6} parent=43 // pred_region
        %p567 = scmp.lt.s32.totalorder %s16, 1
        %s568 = scalar_select %p567, %s16, 1
        %s569 = smul.addr %s568, 4
        %s570 = scalar_lea.vmem %s4, %s569
      $region48: #{basic_block_forward.6} parent=43 // pred_fallthru
        _
    $region44: #{basic_block_forward.6} parent=5 // pred_fallthru
      _
  $region6: #{basic_block_forward.6} parent=0 // loop_footer
    %s14 = sadd.s32 1, %s10
  $region7: #{basic_block_forward.6} parent=0 // loop_footer_branch
    %9 = sbr.rel target = $region3
  $region8: #{basic_block_forward.6} parent=0 // loop_exit
    _

// kernel: basic_block_forward.7
$region0: #{basic_block_forward.7}
  #allocation0 [shape = 'u32[]', space=smem, size = 0x4, offset = 0x4, fixed_abs, tag = 'smem constant byte address 0x4 - core index']
  #allocation1 [shape = 'u32[144,128]{1,0:T(1,128)}', space=vmem, size = 0x12000, scoped, tag = 'internal scratch']
  %s0 = inlined_call_operand.vmem [shape: bf16[128,72], index: 0, kind: input, shape index: {}]
  %s1 = inlined_call_operand.vmem [shape: bf16[72,128], index: 1, kind: input, shape index: {}]
  %s2 = inlined_call_operand.vmem [shape: f32[1,128], index: 2, kind: input, shape index: {}]
  %s3 = inlined_call_operand.vmem [shape: f32[1,128], index: 3, kind: input, shape index: {}]
  %s4 = inlined_call_operand.vmem [shape: bf16[128,4], index: 4, kind: input, shape index: {}]
  %s5 = inlined_call_operand.vmem [shape: bf16[4,128], index: 5, kind: input, shape index: {}]
  %s6 = inlined_call_operand.vmem [shape: f32[1,128], index: 6, kind: input, shape index: {}]
  %s7 = inlined_call_operand.vmem [shape: f32[1,128], index: 7, kind: input, shape index: {}]
  %s8 = inlined_call_operand.vmem [shape: f32[128,128], index: 8, kind: output, shape index: {}]
  %s9 = sld [smem:[#allocation0]]
  $region65: #{basic_block_forward.7} parent=0
    _
  %s11 = ssub.s32 1, %s9
  %s12 = scalar_select 0, %s11, %s9
  loop: start=0, step=1, limit=4
  $region2: #{basic_block_forward.7} parent=0 // loop_pre_header
    _
  $region3: #{basic_block_forward.7} parent=0 // loop_header
    %s14 = sphi 0, %s18
    %p15 = scmp.ge.s32.totalorder %s14, 4
    %s24 = sphi 0, %s26
    %s27 = sphi 0, %s24
    %s28 = sphi 0, %s27
    %s44 = sphi 0, %s28
    %s48 = sphi 0, %s48
    %s50 = sphi 0, %s48
    %s51 = sphi 0, %s50
    %s65 = sphi 0, %s51
    %s69 = sphi 0, %s69
    %s71 = sphi 0, %s69
    %s72 = sphi 0, %s71
    %s86 = sphi 0, %s72
    %s90 = sphi 0, %s90
    %s92 = sphi 0, %s90
    %s93 = sphi 0, %s92
    %s107 = sphi 0, %s93
    %s113 = sphi 0, %s115
    %s116 = sphi 0, %s113
    %s117 = sphi 0, %s116
    %s133 = sphi 0, %s117
    %s137 = sphi 0, %s137
    %s139 = sphi 0, %s137
    %s140 = sphi 0, %s139
    %s154 = sphi 0, %s140
    %s158 = sphi 0, %s158
    %s160 = sphi 0, %s158
    %s161 = sphi 0, %s160
    %s175 = sphi 0, %s161
    %s179 = sphi 0, %s179
    %s181 = sphi 0, %s179
    %s182 = sphi 0, %s181
    %s196 = sphi 0, %s182
    %s202 = sphi 0, %s204
    %s205 = sphi 0, %s202
    %s206 = sphi 0, %s205
    %s222 = sphi 0, %s206
  $region4: #{basic_block_forward.7} parent=0 // loop_header_branch
    %17 = sbr.rel (%p15) target = $region8
  $region5: #{basic_block_forward.7} parent=0 // loop_body
    %s19 = ssub.s32 %s14, 1
    %s20 = ssub.s32 %s14, 2
    %s21 = sadd.s32 %s14, 1
    %s22 = ssub.s32 %s14, %s21
    %p23 = scmp.eq.s32.totalorder %s22, 0
    %s25 = sadd.s32 %s24, 1
    %s26 = scalar_select %p23, %s24, %s25
    %p29 = pneg %p23
    %p30 = scmp.eq.s32.totalorder %s14, 1
    %p31 = por %p29, %p30
    %p32 = scmp.ne.s32.totalorder %s24, %s27
    %p33 = scmp.eq.s32.totalorder %s14, 0
    %p34 = por %p32, %p33
    %p35 = scmp.ne.s32.totalorder %s24, %s27
    %p36 = scmp.eq.s32.totalorder %s19, 1
    %p37 = por %p35, %p36
    %p38 = scmp.ne.s32.totalorder %s27, %s28
    %p39 = scmp.eq.s32.totalorder %s19, 0
    %p40 = por %p38, %p39
    %p41 = scmp.ne.s32.totalorder %s27, %s28
    %p42 = scmp.eq.s32.totalorder %s20, 1
    %p43 = por %p41, %p42
    %p45 = scmp.ne.s32.totalorder %s28, %s44
    %p46 = scmp.eq.s32.totalorder %s20, 0
    %p47 = por %p45, %p46
    %s49 = sadd.s32 %s48, 1
    %p52 = scmp.eq.s32.totalorder %s14, 1
    %p53 = scmp.ne.s32.totalorder %s48, %s50
    %p54 = scmp.eq.s32.totalorder %s14, 0
    %p55 = por %p53, %p54
    %p56 = scmp.ne.s32.totalorder %s48, %s50
    %p57 = scmp.eq.s32.totalorder %s19, 1
    %p58 = por %p56, %p57
    %p59 = scmp.ne.s32.totalorder %s50, %s51
    %p60 = scmp.eq.s32.totalorder %s19, 0
    %p61 = por %p59, %p60
    %p62 = scmp.ne.s32.totalorder %s50, %s51
    %p63 = scmp.eq.s32.totalorder %s20, 1
    %p64 = por %p62, %p63
    %p66 = scmp.ne.s32.totalorder %s51, %s65
    %p67 = scmp.eq.s32.totalorder %s20, 0
    %p68 = por %p66, %p67
    %s70 = sadd.s32 %s69, 1
    %p73 = scmp.eq.s32.totalorder %s14, 1
    %p74 = scmp.ne.s32.totalorder %s69, %s71
    %p75 = scmp.eq.s32.totalorder %s14, 0
    %p76 = por %p74, %p75
    %p77 = scmp.ne.s32.totalorder %s69, %s71
    %p78 = scmp.eq.s32.totalorder %s19, 1
    %p79 = por %p77, %p78
    %p80 = scmp.ne.s32.totalorder %s71, %s72
    %p81 = scmp.eq.s32.totalorder %s19, 0
    %p82 = por %p80, %p81
    %p83 = scmp.ne.s32.totalorder %s71, %s72
    %p84 = scmp.eq.s32.totalorder %s20, 1
    %p85 = por %p83, %p84
    %p87 = scmp.ne.s32.totalorder %s72, %s86
    %p88 = scmp.eq.s32.totalorder %s20, 0
    %p89 = por %p87, %p88
    %s91 = sadd.s32 %s90, 1
    %p94 = scmp.eq.s32.totalorder %s14, 1
    %p95 = scmp.ne.s32.totalorder %s90, %s92
    %p96 = scmp.eq.s32.totalorder %s14, 0
    %p97 = por %p95, %p96
    %p98 = scmp.ne.s32.totalorder %s90, %s92
    %p99 = scmp.eq.s32.totalorder %s19, 1
    %p100 = por %p98, %p99
    %p101 = scmp.ne.s32.totalorder %s92, %s93
    %p102 = scmp.eq.s32.totalorder %s19, 0
    %p103 = por %p101, %p102
    %p104 = scmp.ne.s32.totalorder %s92, %s93
    %p105 = scmp.eq.s32.totalorder %s20, 1
    %p106 = por %p104, %p105
    %p108 = scmp.ne.s32.totalorder %s93, %s107
    %p109 = scmp.eq.s32.totalorder %s20, 0
    %p110 = por %p108, %p109
    %s111 = ssub.s32 %s14, %s21
    %p112 = scmp.eq.s32.totalorder %s111, 0
    %s114 = sadd.s32 %s113, 1
    %s115 = scalar_select %p112, %s113, %s114
    %p118 = pneg %p112
    %p119 = scmp.eq.s32.totalorder %s14, 1
    %p120 = por %p118, %p119
    %p121 = scmp.ne.s32.totalorder %s113, %s116
    %p122 = scmp.eq.s32.totalorder %s14, 0
    %p123 = por %p121, %p122
    %p124 = scmp.ne.s32.totalorder %s113, %s116
    %p125 = scmp.eq.s32.totalorder %s19, 1
    %p126 = por %p124, %p125
    %p127 = scmp.ne.s32.totalorder %s116, %s117
    %p128 = scmp.eq.s32.totalorder %s19, 0
    %p129 = por %p127, %p128
    %p130 = scmp.ne.s32.totalorder %s116, %s117
    %p131 = scmp.eq.s32.totalorder %s20, 1
    %p132 = por %p130, %p131
    %p134 = scmp.ne.s32.totalorder %s117, %s133
    %p135 = scmp.eq.s32.totalorder %s20, 0
    %p136 = por %p134, %p135
    %s138 = sadd.s32 %s137, 1
    %p141 = scmp.eq.s32.totalorder %s14, 1
    %p142 = scmp.ne.s32.totalorder %s137, %s139
    %p143 = scmp.eq.s32.totalorder %s14, 0
    %p144 = por %p142, %p143
    %p145 = scmp.ne.s32.totalorder %s137, %s139
    %p146 = scmp.eq.s32.totalorder %s19, 1
    %p147 = por %p145, %p146
    %p148 = scmp.ne.s32.totalorder %s139, %s140
    %p149 = scmp.eq.s32.totalorder %s19, 0
    %p150 = por %p148, %p149
    %p151 = scmp.ne.s32.totalorder %s139, %s140
    %p152 = scmp.eq.s32.totalorder %s20, 1
    %p153 = por %p151, %p152
    %p155 = scmp.ne.s32.totalorder %s140, %s154
    %p156 = scmp.eq.s32.totalorder %s20, 0
    %p157 = por %p155, %p156
    %s159 = sadd.s32 %s158, 1
    %p162 = scmp.eq.s32.totalorder %s14, 1
    %p163 = scmp.ne.s32.totalorder %s158, %s160
    %p164 = scmp.eq.s32.totalorder %s14, 0
    %p165 = por %p163, %p164
    %p166 = scmp.ne.s32.totalorder %s158, %s160
    %p167 = scmp.eq.s32.totalorder %s19, 1
    %p168 = por %p166, %p167
    %p169 = scmp.ne.s32.totalorder %s160, %s161
    %p170 = scmp.eq.s32.totalorder %s19, 0
    %p171 = por %p169, %p170
    %p172 = scmp.ne.s32.totalorder %s160, %s161
    %p173 = scmp.eq.s32.totalorder %s20, 1
    %p174 = por %p172, %p173
    %p176 = scmp.ne.s32.totalorder %s161, %s175
    %p177 = scmp.eq.s32.totalorder %s20, 0
    %p178 = por %p176, %p177
    %s180 = sadd.s32 %s179, 1
    %p183 = scmp.eq.s32.totalorder %s14, 1
    %p184 = scmp.ne.s32.totalorder %s179, %s181
    %p185 = scmp.eq.s32.totalorder %s14, 0
    %p186 = por %p184, %p185
    %p187 = scmp.ne.s32.totalorder %s179, %s181
    %p188 = scmp.eq.s32.totalorder %s19, 1
    %p189 = por %p187, %p188
    %p190 = scmp.ne.s32.totalorder %s181, %s182
    %p191 = scmp.eq.s32.totalorder %s19, 0
    %p192 = por %p190, %p191
    %p193 = scmp.ne.s32.totalorder %s181, %s182
    %p194 = scmp.eq.s32.totalorder %s20, 1
    %p195 = por %p193, %p194
    %p197 = scmp.ne.s32.totalorder %s182, %s196
    %p198 = scmp.eq.s32.totalorder %s20, 0
    %p199 = por %p197, %p198
    %s200 = ssub.s32 %s14, %s21
    %p201 = scmp.eq.s32.totalorder %s200, 0
    %s203 = sadd.s32 %s202, 1
    %s204 = scalar_select %p201, %s202, %s203
    %p207 = pneg %p201
    %p208 = scmp.eq.s32.totalorder %s14, 1
    %p209 = por %p207, %p208
    %p210 = scmp.ne.s32.totalorder %s202, %s205
    %p211 = scmp.eq.s32.totalorder %s14, 0
    %p212 = por %p210, %p211
    %p213 = scmp.ne.s32.totalorder %s202, %s205
    %p214 = scmp.eq.s32.totalorder %s19, 1
    %p215 = por %p213, %p214
    %p216 = scmp.ne.s32.totalorder %s205, %s206
    %p217 = scmp.eq.s32.totalorder %s19, 0
    %p218 = por %p216, %p217
    %p219 = scmp.ne.s32.totalorder %s205, %s206
    %p220 = scmp.eq.s32.totalorder %s20, 1
    %p221 = por %p219, %p220
    %p223 = scmp.ne.s32.totalorder %s206, %s222
    %p224 = scmp.eq.s32.totalorder %s20, 0
    %p225 = por %p223, %p224
    %p226 = scmp.le.s32.totalorder 1, %s14
    %p227 = scmp.lt.s32.totalorder %s14, 3
    %p228 = pnand %p226, %p227
    %p229 = pneg %p228
    // Predicated region
    $region9: #{basic_block_forward.7} parent=5 // pred_check
      _
    $region10: #{basic_block_forward.7} parent=5 // pred_check_branch
      %231 = sbr.rel (%p228) target = $region12
    $region11: #{basic_block_forward.7} parent=5 // pred_region
      %s232 = ssub.s32 %s14, 1
      // Predicated region
      $region13: #{basic_block_forward.7} parent=11 // pred_check
        %p233 = pneg %p61
      $region14: #{basic_block_forward.7} parent=11 // pred_check_branch
        %235 = sbr.rel (%p233) target = $region16
      $region15: #{basic_block_forward.7} parent=11 // pred_region
        _
      $region16: #{basic_block_forward.7} parent=11 // pred_fallthru
        _
      // Predicated region
      $region17: #{basic_block_forward.7} parent=11 // pred_check
        %p236 = pneg %p82
      $region18: #{basic_block_forward.7} parent=11 // pred_check_branch
        %238 = sbr.rel (%p236) target = $region20
      $region19: #{basic_block_forward.7} parent=11 // pred_region
        _
      $region20: #{basic_block_forward.7} parent=11 // pred_fallthru
        _
      // Predicated region
      $region21: #{basic_block_forward.7} parent=11 // pred_check
        %p239 = pneg %p103
      $region22: #{basic_block_forward.7} parent=11 // pred_check_branch
        %241 = sbr.rel (%p239) target = $region24
      $region23: #{basic_block_forward.7} parent=11 // pred_region
        _
      $region24: #{basic_block_forward.7} parent=11 // pred_fallthru
        _
      // Predicated region
      $region25: #{basic_block_forward.7} parent=11 // pred_check
        %p242 = pneg %p150
      $region26: #{basic_block_forward.7} parent=11 // pred_check_branch
        %244 = sbr.rel (%p242) target = $region28
      $region27: #{basic_block_forward.7} parent=11 // pred_region
        _
      $region28: #{basic_block_forward.7} parent=11 // pred_fallthru
        _
      // Predicated region
      $region29: #{basic_block_forward.7} parent=11 // pred_check
        %p245 = pneg %p171
      $region30: #{basic_block_forward.7} parent=11 // pred_check_branch
        %247 = sbr.rel (%p245) target = $region32
      $region31: #{basic_block_forward.7} parent=11 // pred_region
        _
      $region32: #{basic_block_forward.7} parent=11 // pred_fallthru
        _
      // Predicated region
      $region33: #{basic_block_forward.7} parent=11 // pred_check
        %p248 = pneg %p192
      $region34: #{basic_block_forward.7} parent=11 // pred_check_branch
        %250 = sbr.rel (%p248) target = $region36
      $region35: #{basic_block_forward.7} parent=11 // pred_region
        _
      $region36: #{basic_block_forward.7} parent=11 // pred_fallthru
        _
    $region12: #{basic_block_forward.7} parent=5 // pred_fallthru
      _
    %p251 = scmp.lt.s32.totalorder %s14, 2
    // Predicated region
    $region37: #{basic_block_forward.7} parent=5 // pred_check
      %p252 = pneg %p251
    $region38: #{basic_block_forward.7} parent=5 // pred_check_branch
      %254 = sbr.rel (%p252) target = $region40
    $region39: #{basic_block_forward.7} parent=5 // pred_region
      // Predicated region
      $region41: #{basic_block_forward.7} parent=39 // pred_check
        %p255 = pneg %p34
      $region42: #{basic_block_forward.7} parent=39 // pred_check_branch
        %257 = sbr.rel (%p255) target = $region44
      $region43: #{basic_block_forward.7} parent=39 // pred_region
        %s258 = smul.u32 8, %s14
        %p259 = scmp.lt.s32.totalorder %s258, 15
        %s260 = scalar_select %p259, %s258, 15
        %s261 = smul.addr %s260, 4
        %s262 = scalar_lea.vmem %s0, %s261
        %s263 = smul.u32 8, %s14
      $region44: #{basic_block_forward.7} parent=39 // pred_fallthru
        _
      // Predicated region
      $region45: #{basic_block_forward.7} parent=39 // pred_check
        %p264 = pneg %p123
      $region46: #{basic_block_forward.7} parent=39 // pred_check_branch
        %266 = sbr.rel (%p264) target = $region48
      $region47: #{basic_block_forward.7} parent=39 // pred_region
        %s267 = smul.u32 8, %s14
        %p268 = scmp.lt.s32.totalorder %s267, 15
        %s269 = scalar_select %p268, %s267, 15
        %s270 = smul.addr %s269, 4
        %s271 = scalar_lea.vmem %s4, %s270
        %s272 = smul.u32 8, %s14
      $region48: #{basic_block_forward.7} parent=39 // pred_fallthru
        _
    $region40: #{basic_block_forward.7} parent=5 // pred_fallthru
      _
    %p273 = scmp.le.s32.totalorder 1, %s14
    %p274 = scmp.lt.s32.totalorder %s14, 3
    %p275 = pnand %p273, %p274
    %p276 = pneg %p275
    // Predicated region
    $region49: #{basic_block_forward.7} parent=5 // pred_check
      _
    $region50: #{basic_block_forward.7} parent=5 // pred_check_branch
      %278 = sbr.rel (%p275) target = $region52
    $region51: #{basic_block_forward.7} parent=5 // pred_region
      %s279 = ssub.s32 %s14, 1
      %s280 = smul.u32 8, %s19
      %p281 = scmp.lt.s32.totalorder %s280, 15
      %s282 = scalar_select %p281, %s280, 15
      %s283 = smul.addr %s282, 4
      %s284 = scalar_lea.vmem %s0, %s283
      %p285 = pneg %p40
      %p286 = pneg %p37
      %p287 = pneg %p61
      %p288 = pneg %p58
      %p289 = pneg %p82
      %p290 = pneg %p79
      %p291 = pneg %p103
      %p292 = pneg %p100
      %s293 = smul.u32 8, %s19
      %p294 = scmp.lt.s32.totalorder %s293, 15
      %s295 = scalar_select %p294, %s293, 15
      %s296 = smul.addr %s295, 4
      %s297 = scalar_lea.vmem %s4, %s296
      %p298 = pneg %p129
      %p299 = pneg %p126
      %p300 = pneg %p150
      %p301 = pneg %p147
      %p302 = pneg %p171
      %p303 = pneg %p168
      %p304 = pneg %p192
      %p305 = pneg %p189
      %p306 = pneg %p218
      %p307 = pneg %p215
      %s308 = smul.u32 8, %s19
      %p309 = scmp.lt.s32.totalorder %s308, 15
      %s310 = scalar_select %p309, %s308, 15
      %s311 = smul.addr %s310, 8
      %s312 = scalar_lea.vmem %s8, %s311
      %s313 = smul.u32 8, %s19
      %p314 = scmp.lt.s32.totalorder %s313, 15
      %s315 = scalar_select %p314, %s313, 15
      %s316 = smul.addr %s315, 4
      %s317 = scalar_lea.vmem %s0, %s316
      %s318 = smul.u32 8, %s19
      %s319 = smul.u32 8, %s19
      %p320 = scmp.lt.s32.totalorder %s319, 15
      %s321 = scalar_select %p320, %s319, 15
      %s322 = smul.addr %s321, 4
      %s323 = scalar_lea.vmem %s4, %s322
      %s324 = smul.u32 8, %s19
      %s325 = smul.u32 8, %s19
      %p326 = scmp.lt.s32.totalorder %s325, 15
      %s327 = scalar_select %p326, %s325, 15
      %s328 = smul.addr %s327, 8
      %s329 = scalar_lea.vmem %s8, %s328
      %s330 = smul.u32 8, %s19
      %v332 = vld [vmem:[%s317] sm:$0xf]
      %v333 = vld [vmem:[%s317 + $0x4] sm:$0xf]
      %v334 = vld [vmem:[%s317 + $0x8] sm:$0xf]
      %v335 = vld [vmem:[%s317 + $0xc] sm:$0xf]
      %v336 = vld [vmem:[%s317 + $0x10] sm:$0xf]
      %v337 = vld [vmem:[%s317 + $0x14] sm:$0xf]
      %v338 = vld [vmem:[%s317 + $0x18] sm:$0xf]
      %v339 = vld [vmem:[%s317 + $0x1c] sm:$0xf]
      %v340 = vld [vmem:[%s1] sm:$0xf]
      %v341 = vld [vmem:[%s1 + $0x4] sm:$0xf]
      %v342 = vld [vmem:[%s1 + $0x8] sm:$0xf]
      %v343 = vld [vmem:[%s1 + $0xc] sm:$0xf]
      %v344 = vld [vmem:[%s1 + $0x10] sm:$0xf]
      %v345 = vld [vmem:[%s1 + $0x14] sm:$0xf]
      %v346 = vld [vmem:[%s1 + $0x18] sm:$0xf]
      %v347 = vld [vmem:[%s1 + $0x1c] sm:$0xf]
      %v348 = vld [vmem:[%s1 + $0x20] sm:$0xf]
      %v357 = vunpack.c.l.b16 %v332
      %v358 = vunpack.c.l.b16 %v333
      %v359 = vunpack.c.l.b16 %v334
      %v360 = vunpack.c.l.b16 %v335
      %v361 = vunpack.c.l.b16 %v336
      %v362 = vunpack.c.l.b16 %v337
      %v363 = vunpack.c.l.b16 %v338
      %v364 = vunpack.c.l.b16 %v339
      %v365 = vpack.c.b16 %v358, %v357
      %v366 = vpack.c.b16 %v360, %v359
      %v367 = vpack.c.b16 %v362, %v361
      %v368 = vpack.c.b16 %v364, %v363
      %v378 = vunpack.c.l.b16 %v340
      %v379 = vunpack.c.l.b16 %v341
      %v380 = vunpack.c.l.b16 %v342
      %v381 = vunpack.c.l.b16 %v343
      %v382 = vunpack.c.l.b16 %v344
      %v383 = vunpack.c.l.b16 %v345
      %v384 = vunpack.c.l.b16 %v346
      %v385 = vunpack.c.l.b16 %v347
      %v386 = vunpack.c.l.b16 %v348
      %v387 = vpack.c.b16 %v379, %v378
      %v388 = vpack.c.b16 %v381, %v380
      %v389 = vpack.c.b16 %v383, %v382
      %v390 = vpack.c.b16 %v385, %v384
      %v391 = vpack.c.b16 %v386, %v386
      %vm396 = vcmask 588800
      %v398 = vsel %vm396, %v365, 0
      %v401 = vsel %vm396, %v366, 0
      %v404 = vsel %vm396, %v367, 0
      %v407 = vsel %vm396, %v368, 0
      %vm409 = vcmask 1043456
      %v411 = vsel %vm409, %v391, 0
      %413 = vmatprep.subr.bf16.mxu0 0
      %414 = vmatpush1.bf16.msra.mxu0 %v387
      %415 = vmatprep.subr.bf16.mxu0 0
      %416 = vmatpush1.bf16.msra.mxu0 %v388
      %417 = vmatprep.subr.bf16.mxu0 0
      %418 = vmatpush1.bf16.msra.mxu0 %v389
      %419 = vmatprep.subr.bf16.mxu0 0
      %420 = vmatpush1.bf16.msra.mxu0 %v390
      %421 = vmatprep.subr.bf16.mxu0 0
      %422 = vmatpush1.bf16.msra.mxu0 %v411
      %423 = vmatprep.subr.bf16.mxu0 0
      %424 = vmatpush1.bf16.msra.mxu0 0
      %425 = vmatprep.subr.bf16.mxu0 0
      %426 = vmatpush1.bf16.msra.mxu0 0
      %427 = vmatprep.subr.bf16.mxu0 0
      %428 = vmatpush1.bf16.msra.mxu0 0
      %429 = vmatprep.subr.bf16.mxu0 0
      %430 = vmatpush1.bf16.msra.mxu0 0
      %431 = vmatprep.subr.bf16.mxu0 0
      %432 = vmatpush1.bf16.msra.mxu0 0
      %433 = vmatprep.subr.bf16.mxu0 0
      %434 = vmatpush1.bf16.msra.mxu0 0
      %435 = vmatprep.subr.bf16.mxu0 0
      %436 = vmatpush1.bf16.msra.mxu0 0
      %437 = vmatprep.subr.bf16.mxu0 0
      %438 = vmatpush1.bf16.msra.mxu0 0
      %439 = vmatprep.subr.bf16.mxu0 0
      %440 = vmatpush1.bf16.msra.mxu0 0
      %441 = vmatprep.subr.bf16.mxu0 0
      %442 = vmatpush1.bf16.msra.mxu0 0
      %443 = vmatprep.subr.bf16.mxu0 0
      %444 = vmatpush1.bf16.msra.mxu0 0
      %445 = vmatprep.mubr.bf16.mxu0 0
      %446 = vmatmul.mubr.bf16.gmra.mrb[0].mxu0 %v398
      %v447 = vpop.f32.mrb[0].mxu0
      %v448 = vadd.f32 0.0, %v447
      %v449 = vpop.f32.mrb[0].mxu0
      %v450 = vpop.f32.mrb[0].mxu0
      %v451 = vadd.f32 0.0, %v450
      %v452 = vpop.f32.mrb[0].mxu0
      %453 = vmatprep.mubr.bf16.mxu0 0
      %454 = vmatmul.mubr.bf16.gmra.mrb[0].mxu0 %v401
      %v455 = vpop.f32.mrb[0].mxu0
      %v456 = vadd.f32 0.0, %v455
      %v457 = vpop.f32.mrb[0].mxu0
      %v458 = vpop.f32.mrb[0].mxu0
      %v459 = vadd.f32 0.0, %v458
      %v460 = vpop.f32.mrb[0].mxu0
      %461 = vmatprep.mubr.bf16.mxu0 0
      %462 = vmatmul.mubr.bf16.gmra.mrb[0].mxu0 %v404
      %v463 = vpop.f32.mrb[0].mxu0
      %v464 = vadd.f32 0.0, %v463
      %v465 = vpop.f32.mrb[0].mxu0
      %v466 = vpop.f32.mrb[0].mxu0
      %v467 = vadd.f32 0.0, %v466
      %v468 = vpop.f32.mrb[0].mxu0
      %469 = vmatprep.mubr.bf16.mxu0 0
      %470 = vmatmul.mubr.bf16.gmra.mrb[0].mxu0 %v407
      %v471 = vpop.f32.mrb[0].mxu0
      %v472 = vadd.f32 0.0, %v471
      %v473 = vpop.f32.mrb[0].mxu0
      %v474 = vpop.f32.mrb[0].mxu0
      %v475 = vadd.f32 0.0, %v474
      %v476 = vpop.f32.mrb[0].mxu0
      %477 = vdwg.mxu0
      %v478 = vld [vmem:[%s2] sm:$0x1]
      %v480 = vlaneseq
      %v481 = vshrl.u32 %v480, 7
      %v482 = vsub.s32 0, %v481
      %v483 = vrot.slane %v478, %v482
      %v485 = vmul.f32 %v448, %v483
      %v486 = vmul.f32 %v451, %v483
      %v487 = vmul.f32 %v456, %v483
      %v488 = vmul.f32 %v459, %v483
      %v489 = vmul.f32 %v464, %v483
      %v490 = vmul.f32 %v467, %v483
      %v491 = vmul.f32 %v472, %v483
      %v492 = vmul.f32 %v475, %v483
      %v493 = vld [vmem:[%s3] sm:$0x1]
      %v495 = vlaneseq
      %v496 = vshrl.u32 %v495, 7
      %v497 = vsub.s32 0, %v496
      %v498 = vrot.slane %v493, %v497
      %v500 = vadd.f32 %v485, %v498
      %v501 = vadd.f32 %v486, %v498
      %v502 = vadd.f32 %v487, %v498
      %v503 = vadd.f32 %v488, %v498
      %v504 = vadd.f32 %v489, %v498
      %v505 = vadd.f32 %v490, %v498
      %v506 = vadd.f32 %v491, %v498
      %v507 = vadd.f32 %v492, %v498
      %v508 = vld [vmem:[%s323] sm:$0xf]
      %v509 = vld [vmem:[%s323 + $0x4] sm:$0xf]
      %v510 = vld [vmem:[%s323 + $0x8] sm:$0xf]
      %v511 = vld [vmem:[%s323 + $0xc] sm:$0xf]
      %v512 = vld [vmem:[%s323 + $0x10] sm:$0xf]
      %v513 = vld [vmem:[%s323 + $0x14] sm:$0xf]
      %v514 = vld [vmem:[%s323 + $0x18] sm:$0xf]
      %v515 = vld [vmem:[%s323 + $0x1c] sm:$0xf]
      %v516 = vld [vmem:[%s5] sm:$0x3]
      %v525 = vunpack.c.l.b16 %v508
      %v526 = vunpack.c.l.b16 %v509
      %v527 = vunpack.c.l.b16 %v510
      %v528 = vunpack.c.l.b16 %v511
      %v529 = vunpack.c.l.b16 %v512
      %v530 = vunpack.c.l.b16 %v513
      %v531 = vunpack.c.l.b16 %v514
      %v532 = vunpack.c.l.b16 %v515
      %v533 = vpack.c.b16 %v526, %v525
      %v534 = vpack.c.b16 %v528, %v527
      %v535 = vpack.c.b16 %v530, %v529
      %v536 = vpack.c.b16 %v532, %v531
      %vm537 = vcmask 31744
      %v539 = vsel %vm537, %v533, 0
      %v542 = vsel %vm537, %v534, 0
      %v545 = vsel %vm537, %v535, 0
      %v548 = vsel %vm537, %v536, 0
      %vm550 = vcmask 1041408
      %v552 = vsel %vm550, %v516, 0
      %554 = vmatprep.subr.bf16.mxu0 0
      %555 = vmatpush1.bf16.msra.mxu0 %v552
      %556 = vmatprep.subr.bf16.mxu0 0
      %557 = vmatpush1.bf16.msra.mxu0 0
      %558 = vmatprep.subr.bf16.mxu0 0
      %559 = vmatpush1.bf16.msra.mxu0 0
      %560 = vmatprep.subr.bf16.mxu0 0
      %561 = vmatpush1.bf16.msra.mxu0 0
      %562 = vmatprep.subr.bf16.mxu0 0
      %563 = vmatpush1.bf16.msra.mxu0 0
      %564 = vmatprep.subr.bf16.mxu0 0
      %565 = vmatpush1.bf16.msra.mxu0 0
      %566 = vmatprep.subr.bf16.mxu0 0
      %567 = vmatpush1.bf16.msra.mxu0 0
      %568 = vmatprep.subr.bf16.mxu0 0
      %569 = vmatpush1.bf16.msra.mxu0 0
      %570 = vmatprep.subr.bf16.mxu0 0
      %571 = vmatpush1.bf16.msra.mxu0 0
      %572 = vmatprep.subr.bf16.mxu0 0
      %573 = vmatpush1.bf16.msra.mxu0 0
      %574 = vmatprep.subr.bf16.mxu0 0
      %575 = vmatpush1.bf16.msra.mxu0 0
      %576 = vmatprep.subr.bf16.mxu0 0
      %577 = vmatpush1.bf16.msra.mxu0 0
      %578 = vmatprep.subr.bf16.mxu0 0
      %579 = vmatpush1.bf16.msra.mxu0 0
      %580 = vmatprep.subr.bf16.mxu0 0
      %581 = vmatpush1.bf16.msra.mxu0 0
      %582 = vmatprep.subr.bf16.mxu0 0
      %583 = vmatpush1.bf16.msra.mxu0 0
      %584 = vmatprep.subr.bf16.mxu0 0
      %585 = vmatpush1.bf16.msra.mxu0 0
      %586 = vmatprep.mubr.bf16.mxu0 0
      %587 = vmatmul.mubr.bf16.gmra.mrb[0].mxu0 %v539
      %v588 = vpop.f32.mrb[0].mxu0
      %v589 = vadd.f32 0.0, %v588
      %v590 = vpop.f32.mrb[0].mxu0
      %v591 = vpop.f32.mrb[0].mxu0
      %v592 = vadd.f32 0.0, %v591
      %v593 = vpop.f32.mrb[0].mxu0
      %594 = vmatprep.mubr.bf16.mxu0 0
      %595 = vmatmul.mubr.bf16.gmra.mrb[0].mxu0 %v542
      %v596 = vpop.f32.mrb[0].mxu0
      %v597 = vadd.f32 0.0, %v596
      %v598 = vpop.f32.mrb[0].mxu0
      %v599 = vpop.f32.mrb[0].mxu0
      %v600 = vadd.f32 0.0, %v599
      %v601 = vpop.f32.mrb[0].mxu0
      %602 = vmatprep.mubr.bf16.mxu0 0
      %603 = vmatmul.mubr.bf16.gmra.mrb[0].mxu0 %v545
      %v604 = vpop.f32.mrb[0].mxu0
      %v605 = vadd.f32 0.0, %v604
      %v606 = vpop.f32.mrb[0].mxu0
      %v607 = vpop.f32.mrb[0].mxu0
      %v608 = vadd.f32 0.0, %v607
      %v609 = vpop.f32.mrb[0].mxu0
      %610 = vmatprep.mubr.bf16.mxu0 0
      %611 = vmatmul.mubr.bf16.gmra.mrb[0].mxu0 %v548
      %v612 = vpop.f32.mrb[0].mxu0
      %v613 = vadd.f32 0.0, %v612
      %v614 = vpop.f32.mrb[0].mxu0
      %v615 = vpop.f32.mrb[0].mxu0
      %v616 = vadd.f32 0.0, %v615
      %v617 = vpop.f32.mrb[0].mxu0
      %618 = vdwg.mxu0
      %v619 = vld [vmem:[%s6] sm:$0x1]
      %v621 = vlaneseq
      %v622 = vshrl.u32 %v621, 7
      %v623 = vsub.s32 0, %v622
      %v624 = vrot.slane %v619, %v623
      %v626 = vmul.f32 %v589, %v624
      %v627 = vmul.f32 %v592, %v624
      %v628 = vmul.f32 %v597, %v624
      %v629 = vmul.f32 %v600, %v624
      %v630 = vmul.f32 %v605, %v624
      %v631 = vmul.f32 %v608, %v624
      %v632 = vmul.f32 %v613, %v624
      %v633 = vmul.f32 %v616, %v624
      %v634 = vadd.f32 %v500, %v626
      %v635 = vadd.f32 %v501, %v627
      %v636 = vadd.f32 %v502, %v628
      %v637 = vadd.f32 %v503, %v629
      %v638 = vadd.f32 %v504, %v630
      %v639 = vadd.f32 %v505, %v631
      %v640 = vadd.f32 %v506, %v632
      %v641 = vadd.f32 %v507, %v633
      %v642 = vld [vmem:[%s7] sm:$0x1]
      %v644 = vlaneseq
      %v645 = vshrl.u32 %v644, 7
      %v646 = vsub.s32 0, %v645
      %v647 = vrot.slane %v642, %v646
      %v649 = vadd.f32 %v634, %v647
      %v650 = vadd.f32 %v635, %v647
      %v651 = vadd.f32 %v636, %v647
      %v652 = vadd.f32 %v637, %v647
      %v653 = vadd.f32 %v638, %v647
      %v654 = vadd.f32 %v639, %v647
      %v655 = vadd.f32 %v640, %v647
      %v656 = vadd.f32 %v641, %v647
      %v657 = vmax.f32 %v649, 0.0
      %v658 = vmax.f32 %v650, 0.0
      %v659 = vmax.f32 %v651, 0.0
      %v660 = vmax.f32 %v652, 0.0
      %v661 = vmax.f32 %v653, 0.0
      %v662 = vmax.f32 %v654, 0.0
      %v663 = vmax.f32 %v655, 0.0
      %v664 = vmax.f32 %v656, 0.0
      %665 = vst [vmem:[%s329] sm:$0xff] %v657
      %666 = vst [vmem:[%s329 + $0x8] sm:$0xff] %v658
      %667 = vst [vmem:[%s329 + $0x10] sm:$0xff] %v659
      %668 = vst [vmem:[%s329 + $0x18] sm:$0xff] %v660
      %669 = vst [vmem:[%s329 + $0x20] sm:$0xff] %v661
      %670 = vst [vmem:[%s329 + $0x28] sm:$0xff] %v662
      %671 = vst [vmem:[%s329 + $0x30] sm:$0xff] %v663
      %672 = vst [vmem:[%s329 + $0x38] sm:$0xff] %v664
      %s673 = smul.u32 8, %s19
      %p674 = scmp.lt.s32.totalorder %s673, 15
      %s675 = scalar_select %p674, %s673, 15
      %s676 = smul.addr %s675, 8
      %s677 = scalar_lea.vmem %s8, %s676
      // Predicated region
      $region53: #{basic_block_forward.7} parent=51 // pred_check
        %p678 = pneg %p215
      $region54: #{basic_block_forward.7} parent=51 // pred_check_branch
        %680 = sbr.rel (%p678) target = $region56
      $region55: #{basic_block_forward.7} parent=51 // pred_region
        %s681 = smul.u32 8, %s19
      $region56: #{basic_block_forward.7} parent=51 // pred_fallthru
        _
    $region52: #{basic_block_forward.7} parent=5 // pred_fallthru
      _
    %p682 = scmp.le.s32.totalorder 2, %s14
    // Predicated region
    $region57: #{basic_block_forward.7} parent=5 // pred_check
      %p683 = pneg %p682
    $region58: #{basic_block_forward.7} parent=5 // pred_check_branch
      %685 = sbr.rel (%p683) target = $region60
    $region59: #{basic_block_forward.7} parent=5 // pred_region
      %s686 = ssub.s32 %s14, 2
      // Predicated region
      $region61: #{basic_block_forward.7} parent=59 // pred_check
        %p687 = pneg %p221
      $region62: #{basic_block_forward.7} parent=59 // pred_check_branch
        %689 = sbr.rel (%p687) target = $region64
      $region63: #{basic_block_forward.7} parent=59 // pred_region
        %s690 = smul.u32 8, %s20
        %p691 = scmp.lt.s32.totalorder %s690, 15
        %s692 = scalar_select %p691, %s690, 15
        %s693 = smul.addr %s692, 8
        %s694 = scalar_lea.vmem %s8, %s693
      $region64: #{basic_block_forward.7} parent=59 // pred_fallthru
        _
    $region60: #{basic_block_forward.7} parent=5 // pred_fallthru
      _
  $region6: #{basic_block_forward.7} parent=0 // loop_footer
    %s18 = sadd.s32 1, %s14
  $region7: #{basic_block_forward.7} parent=0 // loop_footer_branch
    %13 = sbr.rel target = $region3
  $region8: #{basic_block_forward.7} parent=0 // loop_exit
    _

</llo_original>
